<compile_context>
chip_gen: v6e
topology: v6e:2x2x1
jax: 0.10.0
libtpu: 0.0.40
codegen_flags: <defaults>
</compile_context>

<pallas_src>
import jax
import jax.numpy as jnp
from jax.experimental import pallas as pl
from jax.experimental.pallas import tpu as pltpu


def conv1x1_hswish_kernel(x_ref, w_ref, b_ref, o_ref):
    # x_ref: (1, Cin, HWp), w_ref: (Cin, TC, 1), b_ref: (TC, 1), o_ref: (1, TC, HWp)
    x = x_ref[0]                      # (Cin, HWp)
    cin = x.shape[0]

    # K = Cin = 3 contraction as pure-f32 VPU broadcast multiply-adds:
    #   y[o, p] = b[o] + sum_c w[o, c] * x[c, p]
    # w_ref[c] is already a contiguous (TC, 1) operand (no lane-select needed).
    y = b_ref[...]                    # (TC, 1) — broadcasts over HWp
    for c in range(cin):              # static unroll (Cin is a compile-time constant)
        y = y + w_ref[c] * x[c:c + 1, :]      # (TC,1) * (1,HWp) -> (TC,HWp)

    # Module tail: t6 = t2 * clamp(t2 + 3, 0, 6)   (the /6 result t7 is unused)
    h = jnp.clip(y + 3.0, 0.0, 6.0)
    o_ref[0] = (y * h).astype(o_ref.dtype)


def _pick_cout_tile(cout):
    # Largest "nice" divisor of Cout (multiple of 8) so the grid tiles evenly.
    for tc in (320, 256, 160, 128, 64, 32, 16, 8):
        if cout % tc == 0:
            return tc
    return cout


def model_forward(x_nchw, weight, bias):
    """x_nchw: (N, Cin, H, W); weight: (Cout, Cin); bias: (Cout,)"""
    N, Cin, H, W = x_nchw.shape
    Cout = weight.shape[0]
    HW = H * W

    # Lane-align the spatial axis so output stores are unmasked (vst, not vst.msk).
    HWp = ((HW + 127) // 128) * 128
    x_flat = x_nchw.reshape(N, Cin, HW)               # free reshape, NCHW preserved
    if HWp != HW:
        x_flat = jnp.pad(x_flat, ((0, 0), (0, 0), (0, HWp - HW)))

    # Weight as (Cin, Cout, 1): each w[c] is a ready-to-broadcast (Cout, 1) column.
    w3 = weight.T.reshape(Cin, Cout, 1)               # 15 KiB transpose — free
    b2d = bias.reshape(Cout, 1)

    TC = _pick_cout_tile(Cout)                        # Cout tile (1280 -> 320)
    n_ct = Cout // TC

    cost = pl.CostEstimate(
        flops=2 * N * Cout * HWp * Cin + 4 * N * Cout * HWp,
        transcendentals=0,
        bytes_accessed=(N * Cin * HWp * 4 + Cout * Cin * 4 + Cout * 4
                        + N * Cout * HWp * 4),
    )

    out_flat = pl.pallas_call(
        conv1x1_hswish_kernel,
        out_shape=jax.ShapeDtypeStruct((N, Cout, HWp), x_nchw.dtype),
        grid_spec=pltpu.PrefetchScalarGridSpec(
            num_scalar_prefetch=0,
            grid=(N, n_ct),                           # (batch, Cout tiles) — both independent
            in_specs=[
                pl.BlockSpec((1, Cin, HWp), lambda n, j: (n, 0, 0)),   # per-batch x (tiny, re-fetched per j)
                pl.BlockSpec((Cin, TC, 1), lambda n, j: (0, j, 0)),    # weight columns for this Cout tile
                pl.BlockSpec((TC, 1), lambda n, j: (j, 0)),            # bias for this Cout tile
            ],
            out_specs=pl.BlockSpec((1, TC, HWp), lambda n, j: (n, j, 0)),
        ),
        compiler_params=pltpu.CompilerParams(
            dimension_semantics=("parallel", "parallel"),   # megacore sharding on v7x
        ),
        cost_estimate=cost,
    )(x_flat, w3, b2d)

    if HWp != HW:
        out_flat = out_flat[:, :, :HW]
    return out_flat.reshape(N, Cout, H, W)            # free reshape back to NCHW


if __name__ == "__main__":
    key = jax.random.PRNGKey(0)
    k_x, k_w, k_b = jax.random.split(key, 3)

    # Small shapes consistent with the module: Cin must be 3, Cout = 1280.
    N, Cin, H, W = 2, 3, 16, 16
    Cout = 1280

    x = jax.random.normal(k_x, (N, Cin, H, W), dtype=jnp.float32)
    # Deterministic "Conv2d(3, 1280, 1)" parameters (kernel size 1 -> (Cout, Cin)).
    weight = jax.random.normal(k_w, (Cout, Cin), dtype=jnp.float32) * 0.1
    bias = jax.random.normal(k_b, (Cout,), dtype=jnp.float32) * 0.1

    out = model_forward(x, weight, bias)
    jax.block_until_ready(out)

    # Reference in plain JAX (module returns t6 = t2 * clamp(t2+3, 0, 6)).
    y_ref = jnp.einsum("nchw,oc->nohw", x, weight) + bias[None, :, None, None]
    ref = y_ref * jnp.clip(y_ref + 3.0, 0.0, 6.0)
    assert out.shape == (N, Cout, H, W)
    assert jnp.allclose(out, ref, atol=1e-5, rtol=1e-5)

    print("KERNEL_OK")
</pallas_src>

<mosaic_0001>
module attributes {stable_mosaic.version = 11 : i64} {
  func.func @conv1x1_hswish_kernel(%arg0: i32, %arg1: i32, %arg2: memref<1x3x256xf32, #tpu.memory_space<vmem>>, %arg3: memref<3x320x1xf32, #tpu.memory_space<vmem>>, %arg4: memref<320x1xf32, #tpu.memory_space<vmem>>, %arg5: memref<1x320x256xf32, #tpu.memory_space<vmem>>) attributes {dimension_semantics = [#tpu.dimension_semantics<parallel>, #tpu.dimension_semantics<parallel>], iteration_bounds = array<i64: 2, 4>, scalar_prefetch = 0 : i64, scratch_operands = 0 : i64, tpu.core_type = #tpu.core_type<tc>, window_params = [{transform_indices = @transform_0, window_bounds = array<i64: 1, 3, 256>}, {transform_indices = @transform_1, window_bounds = array<i64: 3, 320, 1>}, {transform_indices = @transform_2, window_bounds = array<i64: 320, 1>}, {transform_indices = @transform_3, window_bounds = array<i64: 1, 320, 256>}]} {
    %c0 = arith.constant 0 : index
    %c0_0 = arith.constant 0 : index
    %c0_1 = arith.constant 0 : index
    %0 = vector.load %arg2[%c0, %c0_0, %c0_1] : memref<1x3x256xf32, #tpu.memory_space<vmem>>, vector<1x3x256xf32>
    %1 = vector.shape_cast %0 : vector<1x3x256xf32> to vector<3x256xf32>
    %c0_2 = arith.constant 0 : index
    %c0_3 = arith.constant 0 : index
    %2 = vector.load %arg4[%c0_2, %c0_3] : memref<320x1xf32, #tpu.memory_space<vmem>>, vector<320x1xf32>
    %c0_4 = arith.constant 0 : index
    %c0_5 = arith.constant 0 : index
    %c0_6 = arith.constant 0 : index
    %3 = vector.load %arg3[%c0_4, %c0_5, %c0_6] : memref<3x320x1xf32, #tpu.memory_space<vmem>>, vector<1x320x1xf32>
    %4 = vector.shape_cast %3 : vector<1x320x1xf32> to vector<320x1xf32>
    %5 = vector.extract_strided_slice %1 {offsets = [0, 0], sizes = [1, 256], strides = [1, 1]} : vector<3x256xf32> to vector<1x256xf32>
    %6 = vector.broadcast %4 : vector<320x1xf32> to vector<320x256xf32>
    %7 = vector.broadcast %5 : vector<1x256xf32> to vector<320x256xf32>
    %8 = arith.mulf %6, %7 : vector<320x256xf32>
    %9 = vector.broadcast %2 : vector<320x1xf32> to vector<320x256xf32>
    %10 = arith.addf %9, %8 : vector<320x256xf32>
    %c1 = arith.constant 1 : index
    %c0_7 = arith.constant 0 : index
    %c0_8 = arith.constant 0 : index
    %11 = vector.load %arg3[%c1, %c0_7, %c0_8] : memref<3x320x1xf32, #tpu.memory_space<vmem>>, vector<1x320x1xf32>
    %12 = vector.shape_cast %11 : vector<1x320x1xf32> to vector<320x1xf32>
    %13 = vector.extract_strided_slice %1 {offsets = [1, 0], sizes = [1, 256], strides = [1, 1]} : vector<3x256xf32> to vector<1x256xf32>
    %14 = vector.broadcast %12 : vector<320x1xf32> to vector<320x256xf32>
    %15 = vector.broadcast %13 : vector<1x256xf32> to vector<320x256xf32>
    %16 = arith.mulf %14, %15 : vector<320x256xf32>
    %17 = arith.addf %10, %16 : vector<320x256xf32>
    %c2 = arith.constant 2 : index
    %c0_9 = arith.constant 0 : index
    %c0_10 = arith.constant 0 : index
    %18 = vector.load %arg3[%c2, %c0_9, %c0_10] : memref<3x320x1xf32, #tpu.memory_space<vmem>>, vector<1x320x1xf32>
    %19 = vector.shape_cast %18 : vector<1x320x1xf32> to vector<320x1xf32>
    %20 = vector.extract_strided_slice %1 {offsets = [2, 0], sizes = [1, 256], strides = [1, 1]} : vector<3x256xf32> to vector<1x256xf32>
    %21 = vector.broadcast %19 : vector<320x1xf32> to vector<320x256xf32>
    %22 = vector.broadcast %20 : vector<1x256xf32> to vector<320x256xf32>
    %23 = arith.mulf %21, %22 : vector<320x256xf32>
    %24 = arith.addf %17, %23 : vector<320x256xf32>
    %cst = arith.constant 3.000000e+00 : f32
    %25 = vector.broadcast %cst : f32 to vector<320x256xf32>
    %26 = arith.addf %24, %25 : vector<320x256xf32>
    %cst_11 = arith.constant 0.000000e+00 : f32
    %cst_12 = arith.constant 6.000000e+00 : f32
    %27 = vector.broadcast %cst_11 : f32 to vector<320x256xf32>
    %28 = arith.maximumf %27, %26 : vector<320x256xf32>
    %29 = vector.broadcast %cst_12 : f32 to vector<320x256xf32>
    %30 = arith.minimumf %29, %28 : vector<320x256xf32>
    %31 = arith.mulf %24, %30 : vector<320x256xf32>
    %c0_13 = arith.constant 0 : index
    %c0_14 = arith.constant 0 : index
    %c0_15 = arith.constant 0 : index
    %32 = vector.load %arg5[%c0_13, %c0_14, %c0_15] : memref<1x320x256xf32, #tpu.memory_space<vmem>>, vector<1x320x256xf32>
    %33 = vector.shape_cast %32 : vector<1x320x256xf32> to vector<320x256xf32>
    %34 = vector.shape_cast %31 : vector<320x256xf32> to vector<1x320x256xf32>
    tpu.vector_store %arg5[%c0_13, %c0_14, %c0_15], %34 {strides = array<i32>} : memref<1x320x256xf32, #tpu.memory_space<vmem>>, vector<1x320x256xf32>,
    return
  }
  func.func @transform_0(%arg0: i32, %arg1: i32) -> (i32, i32, i32) {
    %c0_i32 = arith.constant 0 : i32
    %c0_i32_0 = arith.constant 0 : i32
    %c0_i32_1 = arith.constant 0 : i32
    return %arg0, %c0_i32, %c0_i32_0 : i32, i32, i32
  }
  func.func @transform_1(%arg0: i32, %arg1: i32) -> (i32, i32, i32) {
    %c0_i32 = arith.constant 0 : i32
    %c0_i32_0 = arith.constant 0 : i32
    %c0_i32_1 = arith.constant 0 : i32
    return %c0_i32, %arg1, %c0_i32_0 : i32, i32, i32
  }
  func.func @transform_2(%arg0: i32, %arg1: i32) -> (i32, i32) {
    %c0_i32 = arith.constant 0 : i32
    %c0_i32_0 = arith.constant 0 : i32
    return %arg1, %c0_i32 : i32, i32
  }
  func.func @transform_3(%arg0: i32, %arg1: i32) -> (i32, i32, i32) {
    %c0_i32 = arith.constant 0 : i32
    %c0_i32_0 = arith.constant 0 : i32
    return %arg0, %arg1, %c0_i32 : i32, i32, i32
  }
}

</mosaic_0001>

<llo_original>
// kernel: tpu_custom_call.1
$region0: #{tpu_custom_call.1}
  #allocation0 [shape = 'u32[]', space=smem, size = 0x4, offset = 0x4, fixed_abs, tag = 'smem constant byte address 0x4 - core index']
  #allocation1 [shape = 'u32[144,128]{1,0:T(1,128)}', space=vmem, size = 0x12000, scoped, tag = 'internal scratch']
  %s0 = inlined_call_operand.vmem [shape: f32[2,3,256], index: 0, kind: input, shape index: {}]
  %s1 = inlined_call_operand.vmem [shape: f32[3,1280,1], index: 1, kind: input, shape index: {}]
  %s2 = inlined_call_operand.vmem [shape: f32[1280,1], index: 2, kind: input, shape index: {}]
  %s3 = inlined_call_operand.hbm [shape: f32[2,1280,256], index: 3, kind: output, shape index: {}]
  %s4 = sld [smem:[#allocation0]]
  $region83: #{tpu_custom_call.1} parent=0
    _
  %s6 = ssub.s32 1, %s4
  %s7 = scalar_select 0, %s6, %s4
  $region1: #{tpu_custom_call.1} parent=0
    #allocation2 [shape = 'u8[983040]{0}', space=vmem, size = 0xf0000, scoped, tag = 'input window, operand 1']
    #allocation3 [shape = 'u8[655360]{0}', space=vmem, size = 0xa0000, scoped, tag = 'output window, operand 0']
    #allocation4 [shape = 's32[2]{0}', space=sflag, size = 0x8, scoped, tag = 'scoped memory for tpu_custom_call.1']
    %8 = vsyncpa [#allocation4], 0
    %s9 = scalar_lea.sflag [#allocation4], 1
    %10 = vsyncpa %s9, 0
    loop: start=0, step=1, limit=10
    $region2: #{tpu_custom_call.1} parent=1 // loop_pre_header
      _
    $region3: #{tpu_custom_call.1} parent=1 // loop_header
      %s12 = sphi 0, %s16
      %p13 = scmp.ge.s32.totalorder %s12, 10
      %s19 = sphi 0, %s31
      %s20 = sphi 0, %s27
      %s21 = sphi 0, %s19
      %s22 = sphi 0, %s20
      %s23 = sphi 0, %s21
      %s24 = sphi 0, %s22
      %s34 = sphi 0, %s36
      %s37 = sphi 0, %s34
      %s38 = sphi 0, %s37
      %s54 = sphi 0, %s38
      %s60 = sphi 0, %s62
      %s63 = sphi 0, %s60
      %s64 = sphi 0, %s63
      %s80 = sphi 0, %s64
      %s86 = sphi 0, %s88
      %s89 = sphi 0, %s86
      %s90 = sphi 0, %s89
      %s106 = sphi 0, %s90
      %s114 = sphi 0, %s116
      %s117 = sphi 0, %s114
      %s118 = sphi 0, %s117
      %s134 = sphi 0, %s118
    $region4: #{tpu_custom_call.1} parent=1 // loop_header_branch
      %15 = sbr.rel (%p13) target = $region8
    $region5: #{tpu_custom_call.1} parent=1 // loop_body
      %s17 = ssub.s32 %s12, 1
      %s18 = ssub.s32 %s12, 2
      %s25 = sadd.s32 1, %s20
      %p26 = scmp.ge.s32.totalorder %s25, 4
      %s27 = scalar_select %p26, 0, %s25
      %s28 = sadd.s32 1, %s19
      %s29 = scalar_select %p26, %s28, %s19
      %p30 = scmp.ge.s32.totalorder %s29, 2
      %s31 = scalar_select %p30, 0, %s29
      %s32 = ssub.s32 %s19, %s31
      %p33 = scmp.eq.s32.totalorder %s32, 0
      %s35 = sadd.s32 %s34, 1
      %s36 = scalar_select %p33, %s34, %s35
      %p39 = pneg %p33
      %p40 = scmp.eq.s32.totalorder %s12, 7
      %p41 = por %p39, %p40
      %p42 = scmp.ne.s32.totalorder %s34, %s37
      %p43 = scmp.eq.s32.totalorder %s12, 0
      %p44 = por %p42, %p43
      %p45 = scmp.ne.s32.totalorder %s34, %s37
      %p46 = scmp.eq.s32.totalorder %s17, 7
      %p47 = por %p45, %p46
      %p48 = scmp.ne.s32.totalorder %s37, %s38
      %p49 = scmp.eq.s32.totalorder %s17, 0
      %p50 = por %p48, %p49
      %p51 = scmp.ne.s32.totalorder %s37, %s38
      %p52 = scmp.eq.s32.totalorder %s18, 7
      %p53 = por %p51, %p52
      %p55 = scmp.ne.s32.totalorder %s38, %s54
      %p56 = scmp.eq.s32.totalorder %s18, 0
      %p57 = por %p55, %p56
      %s58 = ssub.s32 %s20, %s27
      %p59 = scmp.eq.s32.totalorder %s58, 0
      %s61 = sadd.s32 %s60, 1
      %s62 = scalar_select %p59, %s60, %s61
      %p65 = pneg %p59
      %p66 = scmp.eq.s32.totalorder %s12, 7
      %p67 = por %p65, %p66
      %p68 = scmp.ne.s32.totalorder %s60, %s63
      %p69 = scmp.eq.s32.totalorder %s12, 0
      %p70 = por %p68, %p69
      %p71 = scmp.ne.s32.totalorder %s60, %s63
      %p72 = scmp.eq.s32.totalorder %s17, 7
      %p73 = por %p71, %p72
      %p74 = scmp.ne.s32.totalorder %s63, %s64
      %p75 = scmp.eq.s32.totalorder %s17, 0
      %p76 = por %p74, %p75
      %p77 = scmp.ne.s32.totalorder %s63, %s64
      %p78 = scmp.eq.s32.totalorder %s18, 7
      %p79 = por %p77, %p78
      %p81 = scmp.ne.s32.totalorder %s64, %s80
      %p82 = scmp.eq.s32.totalorder %s18, 0
      %p83 = por %p81, %p82
      %s84 = ssub.s32 %s20, %s27
      %p85 = scmp.eq.s32.totalorder %s84, 0
      %s87 = sadd.s32 %s86, 1
      %s88 = scalar_select %p85, %s86, %s87
      %p91 = pneg %p85
      %p92 = scmp.eq.s32.totalorder %s12, 7
      %p93 = por %p91, %p92
      %p94 = scmp.ne.s32.totalorder %s86, %s89
      %p95 = scmp.eq.s32.totalorder %s12, 0
      %p96 = por %p94, %p95
      %p97 = scmp.ne.s32.totalorder %s86, %s89
      %p98 = scmp.eq.s32.totalorder %s17, 7
      %p99 = por %p97, %p98
      %p100 = scmp.ne.s32.totalorder %s89, %s90
      %p101 = scmp.eq.s32.totalorder %s17, 0
      %p102 = por %p100, %p101
      %p103 = scmp.ne.s32.totalorder %s89, %s90
      %p104 = scmp.eq.s32.totalorder %s18, 7
      %p105 = por %p103, %p104
      %p107 = scmp.ne.s32.totalorder %s90, %s106
      %p108 = scmp.eq.s32.totalorder %s18, 0
      %p109 = por %p107, %p108
      %s110 = ssub.s32 %s19, %s31
      %s111 = ssub.s32 %s20, %s27
      %s112 = sor.u32 %s110, %s111
      %p113 = scmp.eq.s32.totalorder %s112, 0
      %s115 = sadd.s32 %s114, 1
      %s116 = scalar_select %p113, %s114, %s115
      %p119 = pneg %p113
      %p120 = scmp.eq.s32.totalorder %s12, 7
      %p121 = por %p119, %p120
      %p122 = scmp.ne.s32.totalorder %s114, %s117
      %p123 = scmp.eq.s32.totalorder %s12, 0
      %p124 = por %p122, %p123
      %p125 = scmp.ne.s32.totalorder %s114, %s117
      %p126 = scmp.eq.s32.totalorder %s17, 7
      %p127 = por %p125, %p126
      %p128 = scmp.ne.s32.totalorder %s117, %s118
      %p129 = scmp.eq.s32.totalorder %s17, 0
      %p130 = por %p128, %p129
      %p131 = scmp.ne.s32.totalorder %s117, %s118
      %p132 = scmp.eq.s32.totalorder %s18, 7
      %p133 = por %p131, %p132
      %p135 = scmp.ne.s32.totalorder %s118, %s134
      %p136 = scmp.eq.s32.totalorder %s18, 0
      %p137 = por %p135, %p136
      %p138 = scmp.le.s32.totalorder 1, %s12
      %p139 = scmp.lt.s32.totalorder %s12, 9
      %p140 = pnand %p138, %p139
      %p141 = pneg %p140
      // Predicated region
      $region9: #{tpu_custom_call.1} parent=5 // pred_check
        _
      $region10: #{tpu_custom_call.1} parent=5 // pred_check_branch
        %143 = sbr.rel (%p140) target = $region12
      $region11: #{tpu_custom_call.1} parent=5 // pred_region
        %s144 = ssub.s32 %s12, 1
      $region12: #{tpu_custom_call.1} parent=5 // pred_fallthru
        _
      %p145 = scmp.lt.s32.totalorder %s12, 8
      // Predicated region
      $region13: #{tpu_custom_call.1} parent=5 // pred_check
        %p146 = pneg %p145
      $region14: #{tpu_custom_call.1} parent=5 // pred_check_branch
        %148 = sbr.rel (%p146) target = $region16
      $region15: #{tpu_custom_call.1} parent=5 // pred_region
        // Predicated region
        $region17: #{tpu_custom_call.1} parent=15 // pred_check
          %p149 = pneg %p44
        $region18: #{tpu_custom_call.1} parent=15 // pred_check_branch
          %151 = sbr.rel (%p149) target = $region20
        $region19: #{tpu_custom_call.1} parent=15 // pred_region
          %p152 = scmp.lt.s32.totalorder %s19, 1
          %s153 = scalar_select %p152, %s19, 1
          %s154 = smul.addr %s153, 2
          %s155 = smul.addr %s154, 4
          %s156 = scalar_lea.vmem %s0, %s155
        $region20: #{tpu_custom_call.1} parent=15 // pred_fallthru
          _
        // Predicated region
        $region21: #{tpu_custom_call.1} parent=15 // pred_check
          %p157 = pneg %p70
        $region22: #{tpu_custom_call.1} parent=15 // pred_check_branch
          %159 = sbr.rel (%p157) target = $region24
        $region23: #{tpu_custom_call.1} parent=15 // pred_region
          %s160 = sand.u32 %s60, 1
          %s161 = sand.u32 %s60, 1
          %s162 = smul.addr %s161, 960
          %s163 = scalar_lea.vmem [#allocation2], %s162
          %s164 = smul.u32 40, %s20
          %s165 = smul.addr %s164, 8
          %s166 = scalar_lea.vmem %s1, %s165
          // Predicated region
          $region25: #{tpu_custom_call.1} parent=23 // pred_check
            _
          $region26: #{tpu_custom_call.1} parent=23 // pred_check_branch
            %168 = sbr.rel (0) target = $region28
          $region27: #{tpu_custom_call.1} parent=23 // pred_region
            // Predicated region
            $region29: #{tpu_custom_call.1} parent=27 // pred_check
              _
            $region30: #{tpu_custom_call.1} parent=27 // pred_check_branch
              %170 = sbr.rel (0) target = $region32
            $region31: #{tpu_custom_call.1} parent=27 // pred_region
              // Predicated region
              $region44: #{tpu_custom_call.1} parent=31 // pred_check
                _
              $region45: #{tpu_custom_call.1} parent=31 // pred_check_branch
                %424 = sbr.rel (0) target = $region47
              $region46: #{tpu_custom_call.1} parent=31 // pred_region
                loop: start=0, step=1, limit=1
                $region48: #{tpu_custom_call.1} parent=46 // loop_pre_header
                  _
                $region49: #{tpu_custom_call.1} parent=46 // loop_header
                  %s426 = sphi 0, %s430
                  %p427 = scmp.ge.s32.totalorder %s426, 1
                  %s431 = sphi %s166, %s166
                  %s432 = sphi %s163, %s163
                $region50: #{tpu_custom_call.1} parent=46 // loop_header_branch
                  %429 = sbr.rel (%p427) target = $region54
                $region51: #{tpu_custom_call.1} parent=46 // loop_body
                  %v433 = vld [vmem:[%s431] sm:$0xff]
                  %434 = vst [vmem:[%s432] sm:$0xff] %v433
                  %v435 = vld [vmem:[%s431 + $0x8] sm:$0xff]
                  %436 = vst [vmem:[%s432 + $0x8] sm:$0xff] %v435
                  %v437 = vld [vmem:[%s431 + $0x10] sm:$0xff]
                  %438 = vst [vmem:[%s432 + $0x10] sm:$0xff] %v437
                  %v439 = vld [vmem:[%s431 + $0x18] sm:$0xff]
                  %440 = vst [vmem:[%s432 + $0x18] sm:$0xff] %v439
                  %v441 = vld [vmem:[%s431 + $0x20] sm:$0xff]
                  %442 = vst [vmem:[%s432 + $0x20] sm:$0xff] %v441
                  %v443 = vld [vmem:[%s431 + $0x28] sm:$0xff]
                  %444 = vst [vmem:[%s432 + $0x28] sm:$0xff] %v443
                  %v445 = vld [vmem:[%s431 + $0x30] sm:$0xff]
                  %446 = vst [vmem:[%s432 + $0x30] sm:$0xff] %v445
                  %v447 = vld [vmem:[%s431 + $0x38] sm:$0xff]
                  %448 = vst [vmem:[%s432 + $0x38] sm:$0xff] %v447
                  %v449 = vld [vmem:[%s431 + $0x40] sm:$0xff]
                  %450 = vst [vmem:[%s432 + $0x40] sm:$0xff] %v449
                  %v451 = vld [vmem:[%s431 + $0x48] sm:$0xff]
                  %452 = vst [vmem:[%s432 + $0x48] sm:$0xff] %v451
                  %v453 = vld [vmem:[%s431 + $0x50] sm:$0xff]
                  %454 = vst [vmem:[%s432 + $0x50] sm:$0xff] %v453
                  %v455 = vld [vmem:[%s431 + $0x58] sm:$0xff]
                  %456 = vst [vmem:[%s432 + $0x58] sm:$0xff] %v455
                  %v457 = vld [vmem:[%s431 + $0x60] sm:$0xff]
                  %458 = vst [vmem:[%s432 + $0x60] sm:$0xff] %v457
                  %v459 = vld [vmem:[%s431 + $0x68] sm:$0xff]
                  %460 = vst [vmem:[%s432 + $0x68] sm:$0xff] %v459
                  %v461 = vld [vmem:[%s431 + $0x70] sm:$0xff]
                  %462 = vst [vmem:[%s432 + $0x70] sm:$0xff] %v461
                  %v463 = vld [vmem:[%s431 + $0x78] sm:$0xff]
                  %464 = vst [vmem:[%s432 + $0x78] sm:$0xff] %v463
                  %v465 = vld [vmem:[%s431 + $0x80] sm:$0xff]
                  %466 = vst [vmem:[%s432 + $0x80] sm:$0xff] %v465
                  %v467 = vld [vmem:[%s431 + $0x88] sm:$0xff]
                  %468 = vst [vmem:[%s432 + $0x88] sm:$0xff] %v467
                  %v469 = vld [vmem:[%s431 + $0x90] sm:$0xff]
                  %470 = vst [vmem:[%s432 + $0x90] sm:$0xff] %v469
                  %v471 = vld [vmem:[%s431 + $0x98] sm:$0xff]
                  %472 = vst [vmem:[%s432 + $0x98] sm:$0xff] %v471
                  %v473 = vld [vmem:[%s431 + $0xa0] sm:$0xff]
                  %474 = vst [vmem:[%s432 + $0xa0] sm:$0xff] %v473
                  %v475 = vld [vmem:[%s431 + $0xa8] sm:$0xff]
                  %476 = vst [vmem:[%s432 + $0xa8] sm:$0xff] %v475
                  %v477 = vld [vmem:[%s431 + $0xb0] sm:$0xff]
                  %478 = vst [vmem:[%s432 + $0xb0] sm:$0xff] %v477
                  %v479 = vld [vmem:[%s431 + $0xb8] sm:$0xff]
                  %480 = vst [vmem:[%s432 + $0xb8] sm:$0xff] %v479
                  %v481 = vld [vmem:[%s431 + $0xc0] sm:$0xff]
                  %482 = vst [vmem:[%s432 + $0xc0] sm:$0xff] %v481
                  %v483 = vld [vmem:[%s431 + $0xc8] sm:$0xff]
                  %484 = vst [vmem:[%s432 + $0xc8] sm:$0xff] %v483
                  %v485 = vld [vmem:[%s431 + $0xd0] sm:$0xff]
                  %486 = vst [vmem:[%s432 + $0xd0] sm:$0xff] %v485
                  %v487 = vld [vmem:[%s431 + $0xd8] sm:$0xff]
                  %488 = vst [vmem:[%s432 + $0xd8] sm:$0xff] %v487
                  %v489 = vld [vmem:[%s431 + $0xe0] sm:$0xff]
                  %490 = vst [vmem:[%s432 + $0xe0] sm:$0xff] %v489
                  %v491 = vld [vmem:[%s431 + $0xe8] sm:$0xff]
                  %492 = vst [vmem:[%s432 + $0xe8] sm:$0xff] %v491
                  %v493 = vld [vmem:[%s431 + $0xf0] sm:$0xff]
                  %494 = vst [vmem:[%s432 + $0xf0] sm:$0xff] %v493
                  %v495 = vld [vmem:[%s431 + $0xf8] sm:$0xff]
                  %496 = vst [vmem:[%s432 + $0xf8] sm:$0xff] %v495
                  %v497 = vld [vmem:[%s431 + $0x100] sm:$0xff]
                  %498 = vst [vmem:[%s432 + $0x100] sm:$0xff] %v497
                  %v499 = vld [vmem:[%s431 + $0x108] sm:$0xff]
                  %500 = vst [vmem:[%s432 + $0x108] sm:$0xff] %v499
                  %v501 = vld [vmem:[%s431 + $0x110] sm:$0xff]
                  %502 = vst [vmem:[%s432 + $0x110] sm:$0xff] %v501
                  %v503 = vld [vmem:[%s431 + $0x118] sm:$0xff]
                  %504 = vst [vmem:[%s432 + $0x118] sm:$0xff] %v503
                  %v505 = vld [vmem:[%s431 + $0x120] sm:$0xff]
                  %506 = vst [vmem:[%s432 + $0x120] sm:$0xff] %v505
                  %v507 = vld [vmem:[%s431 + $0x128] sm:$0xff]
                  %508 = vst [vmem:[%s432 + $0x128] sm:$0xff] %v507
                  %v509 = vld [vmem:[%s431 + $0x130] sm:$0xff]
                  %510 = vst [vmem:[%s432 + $0x130] sm:$0xff] %v509
                  %v511 = vld [vmem:[%s431 + $0x138] sm:$0xff]
                  %512 = vst [vmem:[%s432 + $0x138] sm:$0xff] %v511
                  %v513 = vld [vmem:[%s431 + $0x500] sm:$0xff]
                  %514 = vst [vmem:[%s432 + $0x140] sm:$0xff] %v513
                  %v515 = vld [vmem:[%s431 + $0x508] sm:$0xff]
                  %516 = vst [vmem:[%s432 + $0x148] sm:$0xff] %v515
                  %v517 = vld [vmem:[%s431 + $0x510] sm:$0xff]
                  %518 = vst [vmem:[%s432 + $0x150] sm:$0xff] %v517
                  %v519 = vld [vmem:[%s431 + $0x518] sm:$0xff]
                  %520 = vst [vmem:[%s432 + $0x158] sm:$0xff] %v519
                  %v521 = vld [vmem:[%s431 + $0x520] sm:$0xff]
                  %522 = vst [vmem:[%s432 + $0x160] sm:$0xff] %v521
                  %v523 = vld [vmem:[%s431 + $0x528] sm:$0xff]
                  %524 = vst [vmem:[%s432 + $0x168] sm:$0xff] %v523
                  %v525 = vld [vmem:[%s431 + $0x530] sm:$0xff]
                  %526 = vst [vmem:[%s432 + $0x170] sm:$0xff] %v525
                  %v527 = vld [vmem:[%s431 + $0x538] sm:$0xff]
                  %528 = vst [vmem:[%s432 + $0x178] sm:$0xff] %v527
                  %v529 = vld [vmem:[%s431 + $0x540] sm:$0xff]
                  %530 = vst [vmem:[%s432 + $0x180] sm:$0xff] %v529
                  %v531 = vld [vmem:[%s431 + $0x548] sm:$0xff]
                  %532 = vst [vmem:[%s432 + $0x188] sm:$0xff] %v531
                  %v533 = vld [vmem:[%s431 + $0x550] sm:$0xff]
                  %534 = vst [vmem:[%s432 + $0x190] sm:$0xff] %v533
                  %v535 = vld [vmem:[%s431 + $0x558] sm:$0xff]
                  %536 = vst [vmem:[%s432 + $0x198] sm:$0xff] %v535
                  %v537 = vld [vmem:[%s431 + $0x560] sm:$0xff]
                  %538 = vst [vmem:[%s432 + $0x1a0] sm:$0xff] %v537
                  %v539 = vld [vmem:[%s431 + $0x568] sm:$0xff]
                  %540 = vst [vmem:[%s432 + $0x1a8] sm:$0xff] %v539
                  %v541 = vld [vmem:[%s431 + $0x570] sm:$0xff]
                  %542 = vst [vmem:[%s432 + $0x1b0] sm:$0xff] %v541
                  %v543 = vld [vmem:[%s431 + $0x578] sm:$0xff]
                  %544 = vst [vmem:[%s432 + $0x1b8] sm:$0xff] %v543
                  %v545 = vld [vmem:[%s431 + $0x580] sm:$0xff]
                  %546 = vst [vmem:[%s432 + $0x1c0] sm:$0xff] %v545
                  %v547 = vld [vmem:[%s431 + $0x588] sm:$0xff]
                  %548 = vst [vmem:[%s432 + $0x1c8] sm:$0xff] %v547
                  %v549 = vld [vmem:[%s431 + $0x590] sm:$0xff]
                  %550 = vst [vmem:[%s432 + $0x1d0] sm:$0xff] %v549
                  %v551 = vld [vmem:[%s431 + $0x598] sm:$0xff]
                  %552 = vst [vmem:[%s432 + $0x1d8] sm:$0xff] %v551
                  %v553 = vld [vmem:[%s431 + $0x5a0] sm:$0xff]
                  %554 = vst [vmem:[%s432 + $0x1e0] sm:$0xff] %v553
                  %v555 = vld [vmem:[%s431 + $0x5a8] sm:$0xff]
                  %556 = vst [vmem:[%s432 + $0x1e8] sm:$0xff] %v555
                  %v557 = vld [vmem:[%s431 + $0x5b0] sm:$0xff]
                  %558 = vst [vmem:[%s432 + $0x1f0] sm:$0xff] %v557
                  %v559 = vld [vmem:[%s431 + $0x5b8] sm:$0xff]
                  %560 = vst [vmem:[%s432 + $0x1f8] sm:$0xff] %v559
                  %v561 = vld [vmem:[%s431 + $0x5c0] sm:$0xff]
                  %562 = vst [vmem:[%s432 + $0x200] sm:$0xff] %v561
                  %v563 = vld [vmem:[%s431 + $0x5c8] sm:$0xff]
                  %564 = vst [vmem:[%s432 + $0x208] sm:$0xff] %v563
                  %v565 = vld [vmem:[%s431 + $0x5d0] sm:$0xff]
                  %566 = vst [vmem:[%s432 + $0x210] sm:$0xff] %v565
                  %v567 = vld [vmem:[%s431 + $0x5d8] sm:$0xff]
                  %568 = vst [vmem:[%s432 + $0x218] sm:$0xff] %v567
                  %v569 = vld [vmem:[%s431 + $0x5e0] sm:$0xff]
                  %570 = vst [vmem:[%s432 + $0x220] sm:$0xff] %v569
                  %v571 = vld [vmem:[%s431 + $0x5e8] sm:$0xff]
                  %572 = vst [vmem:[%s432 + $0x228] sm:$0xff] %v571
                  %v573 = vld [vmem:[%s431 + $0x5f0] sm:$0xff]
                  %574 = vst [vmem:[%s432 + $0x230] sm:$0xff] %v573
                  %v575 = vld [vmem:[%s431 + $0x5f8] sm:$0xff]
                  %576 = vst [vmem:[%s432 + $0x238] sm:$0xff] %v575
                  %v577 = vld [vmem:[%s431 + $0x600] sm:$0xff]
                  %578 = vst [vmem:[%s432 + $0x240] sm:$0xff] %v577
                  %v579 = vld [vmem:[%s431 + $0x608] sm:$0xff]
                  %580 = vst [vmem:[%s432 + $0x248] sm:$0xff] %v579
                  %v581 = vld [vmem:[%s431 + $0x610] sm:$0xff]
                  %582 = vst [vmem:[%s432 + $0x250] sm:$0xff] %v581
                  %v583 = vld [vmem:[%s431 + $0x618] sm:$0xff]
                  %584 = vst [vmem:[%s432 + $0x258] sm:$0xff] %v583
                  %v585 = vld [vmem:[%s431 + $0x620] sm:$0xff]
                  %586 = vst [vmem:[%s432 + $0x260] sm:$0xff] %v585
                  %v587 = vld [vmem:[%s431 + $0x628] sm:$0xff]
                  %588 = vst [vmem:[%s432 + $0x268] sm:$0xff] %v587
                  %v589 = vld [vmem:[%s431 + $0x630] sm:$0xff]
                  %590 = vst [vmem:[%s432 + $0x270] sm:$0xff] %v589
                  %v591 = vld [vmem:[%s431 + $0x638] sm:$0xff]
                  %592 = vst [vmem:[%s432 + $0x278] sm:$0xff] %v591
                  %v593 = vld [vmem:[%s431 + $0xa00] sm:$0xff]
                  %594 = vst [vmem:[%s432 + $0x280] sm:$0xff] %v593
                  %v595 = vld [vmem:[%s431 + $0xa08] sm:$0xff]
                  %596 = vst [vmem:[%s432 + $0x288] sm:$0xff] %v595
                  %v597 = vld [vmem:[%s431 + $0xa10] sm:$0xff]
                  %598 = vst [vmem:[%s432 + $0x290] sm:$0xff] %v597
                  %v599 = vld [vmem:[%s431 + $0xa18] sm:$0xff]
                  %600 = vst [vmem:[%s432 + $0x298] sm:$0xff] %v599
                  %v601 = vld [vmem:[%s431 + $0xa20] sm:$0xff]
                  %602 = vst [vmem:[%s432 + $0x2a0] sm:$0xff] %v601
                  %v603 = vld [vmem:[%s431 + $0xa28] sm:$0xff]
                  %604 = vst [vmem:[%s432 + $0x2a8] sm:$0xff] %v603
                  %v605 = vld [vmem:[%s431 + $0xa30] sm:$0xff]
                  %606 = vst [vmem:[%s432 + $0x2b0] sm:$0xff] %v605
                  %v607 = vld [vmem:[%s431 + $0xa38] sm:$0xff]
                  %608 = vst [vmem:[%s432 + $0x2b8] sm:$0xff] %v607
                  %v609 = vld [vmem:[%s431 + $0xa40] sm:$0xff]
                  %610 = vst [vmem:[%s432 + $0x2c0] sm:$0xff] %v609
                  %v611 = vld [vmem:[%s431 + $0xa48] sm:$0xff]
                  %612 = vst [vmem:[%s432 + $0x2c8] sm:$0xff] %v611
                  %v613 = vld [vmem:[%s431 + $0xa50] sm:$0xff]
                  %614 = vst [vmem:[%s432 + $0x2d0] sm:$0xff] %v613
                  %v615 = vld [vmem:[%s431 + $0xa58] sm:$0xff]
                  %616 = vst [vmem:[%s432 + $0x2d8] sm:$0xff] %v615
                  %v617 = vld [vmem:[%s431 + $0xa60] sm:$0xff]
                  %618 = vst [vmem:[%s432 + $0x2e0] sm:$0xff] %v617
                  %v619 = vld [vmem:[%s431 + $0xa68] sm:$0xff]
                  %620 = vst [vmem:[%s432 + $0x2e8] sm:$0xff] %v619
                  %v621 = vld [vmem:[%s431 + $0xa70] sm:$0xff]
                  %622 = vst [vmem:[%s432 + $0x2f0] sm:$0xff] %v621
                  %v623 = vld [vmem:[%s431 + $0xa78] sm:$0xff]
                  %624 = vst [vmem:[%s432 + $0x2f8] sm:$0xff] %v623
                  %v625 = vld [vmem:[%s431 + $0xa80] sm:$0xff]
                  %626 = vst [vmem:[%s432 + $0x300] sm:$0xff] %v625
                  %v627 = vld [vmem:[%s431 + $0xa88] sm:$0xff]
                  %628 = vst [vmem:[%s432 + $0x308] sm:$0xff] %v627
                  %v629 = vld [vmem:[%s431 + $0xa90] sm:$0xff]
                  %630 = vst [vmem:[%s432 + $0x310] sm:$0xff] %v629
                  %v631 = vld [vmem:[%s431 + $0xa98] sm:$0xff]
                  %632 = vst [vmem:[%s432 + $0x318] sm:$0xff] %v631
                  %v633 = vld [vmem:[%s431 + $0xaa0] sm:$0xff]
                  %634 = vst [vmem:[%s432 + $0x320] sm:$0xff] %v633
                  %v635 = vld [vmem:[%s431 + $0xaa8] sm:$0xff]
                  %636 = vst [vmem:[%s432 + $0x328] sm:$0xff] %v635
                  %v637 = vld [vmem:[%s431 + $0xab0] sm:$0xff]
                  %638 = vst [vmem:[%s432 + $0x330] sm:$0xff] %v637
                  %v639 = vld [vmem:[%s431 + $0xab8] sm:$0xff]
                  %640 = vst [vmem:[%s432 + $0x338] sm:$0xff] %v639
                  %v641 = vld [vmem:[%s431 + $0xac0] sm:$0xff]
                  %642 = vst [vmem:[%s432 + $0x340] sm:$0xff] %v641
                  %v643 = vld [vmem:[%s431 + $0xac8] sm:$0xff]
                  %644 = vst [vmem:[%s432 + $0x348] sm:$0xff] %v643
                  %v645 = vld [vmem:[%s431 + $0xad0] sm:$0xff]
                  %646 = vst [vmem:[%s432 + $0x350] sm:$0xff] %v645
                  %v647 = vld [vmem:[%s431 + $0xad8] sm:$0xff]
                  %648 = vst [vmem:[%s432 + $0x358] sm:$0xff] %v647
                  %v649 = vld [vmem:[%s431 + $0xae0] sm:$0xff]
                  %650 = vst [vmem:[%s432 + $0x360] sm:$0xff] %v649
                  %v651 = vld [vmem:[%s431 + $0xae8] sm:$0xff]
                  %652 = vst [vmem:[%s432 + $0x368] sm:$0xff] %v651
                  %v653 = vld [vmem:[%s431 + $0xaf0] sm:$0xff]
                  %654 = vst [vmem:[%s432 + $0x370] sm:$0xff] %v653
                  %v655 = vld [vmem:[%s431 + $0xaf8] sm:$0xff]
                  %656 = vst [vmem:[%s432 + $0x378] sm:$0xff] %v655
                  %v657 = vld [vmem:[%s431 + $0xb00] sm:$0xff]
                  %658 = vst [vmem:[%s432 + $0x380] sm:$0xff] %v657
                  %v659 = vld [vmem:[%s431 + $0xb08] sm:$0xff]
                  %660 = vst [vmem:[%s432 + $0x388] sm:$0xff] %v659
                  %v661 = vld [vmem:[%s431 + $0xb10] sm:$0xff]
                  %662 = vst [vmem:[%s432 + $0x390] sm:$0xff] %v661
                  %v663 = vld [vmem:[%s431 + $0xb18] sm:$0xff]
                  %664 = vst [vmem:[%s432 + $0x398] sm:$0xff] %v663
                  %v665 = vld [vmem:[%s431 + $0xb20] sm:$0xff]
                  %666 = vst [vmem:[%s432 + $0x3a0] sm:$0xff] %v665
                  %v667 = vld [vmem:[%s431 + $0xb28] sm:$0xff]
                  %668 = vst [vmem:[%s432 + $0x3a8] sm:$0xff] %v667
                  %v669 = vld [vmem:[%s431 + $0xb30] sm:$0xff]
                  %670 = vst [vmem:[%s432 + $0x3b0] sm:$0xff] %v669
                  %v671 = vld [vmem:[%s431 + $0xb38] sm:$0xff]
                  %672 = vst [vmem:[%s432 + $0x3b8] sm:$0xff] %v671
                $region52: #{tpu_custom_call.1} parent=46 // loop_footer
                  %s430 = sadd.s32 1, %s426
                $region53: #{tpu_custom_call.1} parent=46 // loop_footer_branch
                  %425 = sbr.rel target = $region49
                $region54: #{tpu_custom_call.1} parent=46 // loop_exit
                  _
              $region47: #{tpu_custom_call.1} parent=31 // pred_fallthru
                _
              // Predicated region
              $region55: #{tpu_custom_call.1} parent=31 // pred_check
                _
              $region56: #{tpu_custom_call.1} parent=31 // pred_check_branch
                %674 = sbr.rel target = $region58
              $region57: #{tpu_custom_call.1} parent=31 // pred_region
                _
              $region58: #{tpu_custom_call.1} parent=31 // pred_fallthru
                _
            $region32: #{tpu_custom_call.1} parent=27 // pred_fallthru
              _
            // Predicated region
            $region33: #{tpu_custom_call.1} parent=27 // pred_check
              _
            $region34: #{tpu_custom_call.1} parent=27 // pred_check_branch
              %172 = sbr.rel target = $region36
            $region35: #{tpu_custom_call.1} parent=27 // pred_region
              %s174 = ssub.s32 256, 1
              loop: start=0, step=1, limit=1
              $region37: #{tpu_custom_call.1} parent=35 // loop_pre_header
                _
              $region38: #{tpu_custom_call.1} parent=35 // loop_header
                %s176 = sphi 0, %s180
                %p177 = scmp.ge.s32.totalorder %s176, 1
                %s181 = sphi %s166, %s166
                %s182 = sphi %s163, %s163
              $region39: #{tpu_custom_call.1} parent=35 // loop_header_branch
                %179 = sbr.rel (%p177) target = $region43
              $region40: #{tpu_custom_call.1} parent=35 // loop_body
                %v183 = vld [vmem:[%s181] sm:%s174]
                %184 = vst [vmem:[%s182] sm:%s174] %v183
                %v185 = vld [vmem:[%s181 + $0x8] sm:%s174]
                %186 = vst [vmem:[%s182 + $0x8] sm:%s174] %v185
                %v187 = vld [vmem:[%s181 + $0x10] sm:%s174]
                %188 = vst [vmem:[%s182 + $0x10] sm:%s174] %v187
                %v189 = vld [vmem:[%s181 + $0x18] sm:%s174]
                %190 = vst [vmem:[%s182 + $0x18] sm:%s174] %v189
                %v191 = vld [vmem:[%s181 + $0x20] sm:%s174]
                %192 = vst [vmem:[%s182 + $0x20] sm:%s174] %v191
                %v193 = vld [vmem:[%s181 + $0x28] sm:%s174]
                %194 = vst [vmem:[%s182 + $0x28] sm:%s174] %v193
                %v195 = vld [vmem:[%s181 + $0x30] sm:%s174]
                %196 = vst [vmem:[%s182 + $0x30] sm:%s174] %v195
                %v197 = vld [vmem:[%s181 + $0x38] sm:%s174]
                %198 = vst [vmem:[%s182 + $0x38] sm:%s174] %v197
                %v199 = vld [vmem:[%s181 + $0x40] sm:%s174]
                %200 = vst [vmem:[%s182 + $0x40] sm:%s174] %v199
                %v201 = vld [vmem:[%s181 + $0x48] sm:%s174]
                %202 = vst [vmem:[%s182 + $0x48] sm:%s174] %v201
                %v203 = vld [vmem:[%s181 + $0x50] sm:%s174]
                %204 = vst [vmem:[%s182 + $0x50] sm:%s174] %v203
                %v205 = vld [vmem:[%s181 + $0x58] sm:%s174]
                %206 = vst [vmem:[%s182 + $0x58] sm:%s174] %v205
                %v207 = vld [vmem:[%s181 + $0x60] sm:%s174]
                %208 = vst [vmem:[%s182 + $0x60] sm:%s174] %v207
                %v209 = vld [vmem:[%s181 + $0x68] sm:%s174]
                %210 = vst [vmem:[%s182 + $0x68] sm:%s174] %v209
                %v211 = vld [vmem:[%s181 + $0x70] sm:%s174]
                %212 = vst [vmem:[%s182 + $0x70] sm:%s174] %v211
                %v213 = vld [vmem:[%s181 + $0x78] sm:%s174]
                %214 = vst [vmem:[%s182 + $0x78] sm:%s174] %v213
                %v215 = vld [vmem:[%s181 + $0x80] sm:%s174]
                %216 = vst [vmem:[%s182 + $0x80] sm:%s174] %v215
                %v217 = vld [vmem:[%s181 + $0x88] sm:%s174]
                %218 = vst [vmem:[%s182 + $0x88] sm:%s174] %v217
                %v219 = vld [vmem:[%s181 + $0x90] sm:%s174]
                %220 = vst [vmem:[%s182 + $0x90] sm:%s174] %v219
                %v221 = vld [vmem:[%s181 + $0x98] sm:%s174]
                %222 = vst [vmem:[%s182 + $0x98] sm:%s174] %v221
                %v223 = vld [vmem:[%s181 + $0xa0] sm:%s174]
                %224 = vst [vmem:[%s182 + $0xa0] sm:%s174] %v223
                %v225 = vld [vmem:[%s181 + $0xa8] sm:%s174]
                %226 = vst [vmem:[%s182 + $0xa8] sm:%s174] %v225
                %v227 = vld [vmem:[%s181 + $0xb0] sm:%s174]
                %228 = vst [vmem:[%s182 + $0xb0] sm:%s174] %v227
                %v229 = vld [vmem:[%s181 + $0xb8] sm:%s174]
                %230 = vst [vmem:[%s182 + $0xb8] sm:%s174] %v229
                %v231 = vld [vmem:[%s181 + $0xc0] sm:%s174]
                %232 = vst [vmem:[%s182 + $0xc0] sm:%s174] %v231
                %v233 = vld [vmem:[%s181 + $0xc8] sm:%s174]
                %234 = vst [vmem:[%s182 + $0xc8] sm:%s174] %v233
                %v235 = vld [vmem:[%s181 + $0xd0] sm:%s174]
                %236 = vst [vmem:[%s182 + $0xd0] sm:%s174] %v235
                %v237 = vld [vmem:[%s181 + $0xd8] sm:%s174]
                %238 = vst [vmem:[%s182 + $0xd8] sm:%s174] %v237
                %v239 = vld [vmem:[%s181 + $0xe0] sm:%s174]
                %240 = vst [vmem:[%s182 + $0xe0] sm:%s174] %v239
                %v241 = vld [vmem:[%s181 + $0xe8] sm:%s174]
                %242 = vst [vmem:[%s182 + $0xe8] sm:%s174] %v241
                %v243 = vld [vmem:[%s181 + $0xf0] sm:%s174]
                %244 = vst [vmem:[%s182 + $0xf0] sm:%s174] %v243
                %v245 = vld [vmem:[%s181 + $0xf8] sm:%s174]
                %246 = vst [vmem:[%s182 + $0xf8] sm:%s174] %v245
                %v247 = vld [vmem:[%s181 + $0x100] sm:%s174]
                %248 = vst [vmem:[%s182 + $0x100] sm:%s174] %v247
                %v249 = vld [vmem:[%s181 + $0x108] sm:%s174]
                %250 = vst [vmem:[%s182 + $0x108] sm:%s174] %v249
                %v251 = vld [vmem:[%s181 + $0x110] sm:%s174]
                %252 = vst [vmem:[%s182 + $0x110] sm:%s174] %v251
                %v253 = vld [vmem:[%s181 + $0x118] sm:%s174]
                %254 = vst [vmem:[%s182 + $0x118] sm:%s174] %v253
                %v255 = vld [vmem:[%s181 + $0x120] sm:%s174]
                %256 = vst [vmem:[%s182 + $0x120] sm:%s174] %v255
                %v257 = vld [vmem:[%s181 + $0x128] sm:%s174]
                %258 = vst [vmem:[%s182 + $0x128] sm:%s174] %v257
                %v259 = vld [vmem:[%s181 + $0x130] sm:%s174]
                %260 = vst [vmem:[%s182 + $0x130] sm:%s174] %v259
                %v261 = vld [vmem:[%s181 + $0x138] sm:%s174]
                %262 = vst [vmem:[%s182 + $0x138] sm:%s174] %v261
                %v263 = vld [vmem:[%s181 + $0x500] sm:%s174]
                %264 = vst [vmem:[%s182 + $0x140] sm:%s174] %v263
                %v265 = vld [vmem:[%s181 + $0x508] sm:%s174]
                %266 = vst [vmem:[%s182 + $0x148] sm:%s174] %v265
                %v267 = vld [vmem:[%s181 + $0x510] sm:%s174]
                %268 = vst [vmem:[%s182 + $0x150] sm:%s174] %v267
                %v269 = vld [vmem:[%s181 + $0x518] sm:%s174]
                %270 = vst [vmem:[%s182 + $0x158] sm:%s174] %v269
                %v271 = vld [vmem:[%s181 + $0x520] sm:%s174]
                %272 = vst [vmem:[%s182 + $0x160] sm:%s174] %v271
                %v273 = vld [vmem:[%s181 + $0x528] sm:%s174]
                %274 = vst [vmem:[%s182 + $0x168] sm:%s174] %v273
                %v275 = vld [vmem:[%s181 + $0x530] sm:%s174]
                %276 = vst [vmem:[%s182 + $0x170] sm:%s174] %v275
                %v277 = vld [vmem:[%s181 + $0x538] sm:%s174]
                %278 = vst [vmem:[%s182 + $0x178] sm:%s174] %v277
                %v279 = vld [vmem:[%s181 + $0x540] sm:%s174]
                %280 = vst [vmem:[%s182 + $0x180] sm:%s174] %v279
                %v281 = vld [vmem:[%s181 + $0x548] sm:%s174]
                %282 = vst [vmem:[%s182 + $0x188] sm:%s174] %v281
                %v283 = vld [vmem:[%s181 + $0x550] sm:%s174]
                %284 = vst [vmem:[%s182 + $0x190] sm:%s174] %v283
                %v285 = vld [vmem:[%s181 + $0x558] sm:%s174]
                %286 = vst [vmem:[%s182 + $0x198] sm:%s174] %v285
                %v287 = vld [vmem:[%s181 + $0x560] sm:%s174]
                %288 = vst [vmem:[%s182 + $0x1a0] sm:%s174] %v287
                %v289 = vld [vmem:[%s181 + $0x568] sm:%s174]
                %290 = vst [vmem:[%s182 + $0x1a8] sm:%s174] %v289
                %v291 = vld [vmem:[%s181 + $0x570] sm:%s174]
                %292 = vst [vmem:[%s182 + $0x1b0] sm:%s174] %v291
                %v293 = vld [vmem:[%s181 + $0x578] sm:%s174]
                %294 = vst [vmem:[%s182 + $0x1b8] sm:%s174] %v293
                %v295 = vld [vmem:[%s181 + $0x580] sm:%s174]
                %296 = vst [vmem:[%s182 + $0x1c0] sm:%s174] %v295
                %v297 = vld [vmem:[%s181 + $0x588] sm:%s174]
                %298 = vst [vmem:[%s182 + $0x1c8] sm:%s174] %v297
                %v299 = vld [vmem:[%s181 + $0x590] sm:%s174]
                %300 = vst [vmem:[%s182 + $0x1d0] sm:%s174] %v299
                %v301 = vld [vmem:[%s181 + $0x598] sm:%s174]
                %302 = vst [vmem:[%s182 + $0x1d8] sm:%s174] %v301
                %v303 = vld [vmem:[%s181 + $0x5a0] sm:%s174]
                %304 = vst [vmem:[%s182 + $0x1e0] sm:%s174] %v303
                %v305 = vld [vmem:[%s181 + $0x5a8] sm:%s174]
                %306 = vst [vmem:[%s182 + $0x1e8] sm:%s174] %v305
                %v307 = vld [vmem:[%s181 + $0x5b0] sm:%s174]
                %308 = vst [vmem:[%s182 + $0x1f0] sm:%s174] %v307
                %v309 = vld [vmem:[%s181 + $0x5b8] sm:%s174]
                %310 = vst [vmem:[%s182 + $0x1f8] sm:%s174] %v309
                %v311 = vld [vmem:[%s181 + $0x5c0] sm:%s174]
                %312 = vst [vmem:[%s182 + $0x200] sm:%s174] %v311
                %v313 = vld [vmem:[%s181 + $0x5c8] sm:%s174]
                %314 = vst [vmem:[%s182 + $0x208] sm:%s174] %v313
                %v315 = vld [vmem:[%s181 + $0x5d0] sm:%s174]
                %316 = vst [vmem:[%s182 + $0x210] sm:%s174] %v315
                %v317 = vld [vmem:[%s181 + $0x5d8] sm:%s174]
                %318 = vst [vmem:[%s182 + $0x218] sm:%s174] %v317
                %v319 = vld [vmem:[%s181 + $0x5e0] sm:%s174]
                %320 = vst [vmem:[%s182 + $0x220] sm:%s174] %v319
                %v321 = vld [vmem:[%s181 + $0x5e8] sm:%s174]
                %322 = vst [vmem:[%s182 + $0x228] sm:%s174] %v321
                %v323 = vld [vmem:[%s181 + $0x5f0] sm:%s174]
                %324 = vst [vmem:[%s182 + $0x230] sm:%s174] %v323
                %v325 = vld [vmem:[%s181 + $0x5f8] sm:%s174]
                %326 = vst [vmem:[%s182 + $0x238] sm:%s174] %v325
                %v327 = vld [vmem:[%s181 + $0x600] sm:%s174]
                %328 = vst [vmem:[%s182 + $0x240] sm:%s174] %v327
                %v329 = vld [vmem:[%s181 + $0x608] sm:%s174]
                %330 = vst [vmem:[%s182 + $0x248] sm:%s174] %v329
                %v331 = vld [vmem:[%s181 + $0x610] sm:%s174]
                %332 = vst [vmem:[%s182 + $0x250] sm:%s174] %v331
                %v333 = vld [vmem:[%s181 + $0x618] sm:%s174]
                %334 = vst [vmem:[%s182 + $0x258] sm:%s174] %v333
                %v335 = vld [vmem:[%s181 + $0x620] sm:%s174]
                %336 = vst [vmem:[%s182 + $0x260] sm:%s174] %v335
                %v337 = vld [vmem:[%s181 + $0x628] sm:%s174]
                %338 = vst [vmem:[%s182 + $0x268] sm:%s174] %v337
                %v339 = vld [vmem:[%s181 + $0x630] sm:%s174]
                %340 = vst [vmem:[%s182 + $0x270] sm:%s174] %v339
                %v341 = vld [vmem:[%s181 + $0x638] sm:%s174]
                %342 = vst [vmem:[%s182 + $0x278] sm:%s174] %v341
                %v343 = vld [vmem:[%s181 + $0xa00] sm:%s174]
                %344 = vst [vmem:[%s182 + $0x280] sm:%s174] %v343
                %v345 = vld [vmem:[%s181 + $0xa08] sm:%s174]
                %346 = vst [vmem:[%s182 + $0x288] sm:%s174] %v345
                %v347 = vld [vmem:[%s181 + $0xa10] sm:%s174]
                %348 = vst [vmem:[%s182 + $0x290] sm:%s174] %v347
                %v349 = vld [vmem:[%s181 + $0xa18] sm:%s174]
                %350 = vst [vmem:[%s182 + $0x298] sm:%s174] %v349
                %v351 = vld [vmem:[%s181 + $0xa20] sm:%s174]
                %352 = vst [vmem:[%s182 + $0x2a0] sm:%s174] %v351
                %v353 = vld [vmem:[%s181 + $0xa28] sm:%s174]
                %354 = vst [vmem:[%s182 + $0x2a8] sm:%s174] %v353
                %v355 = vld [vmem:[%s181 + $0xa30] sm:%s174]
                %356 = vst [vmem:[%s182 + $0x2b0] sm:%s174] %v355
                %v357 = vld [vmem:[%s181 + $0xa38] sm:%s174]
                %358 = vst [vmem:[%s182 + $0x2b8] sm:%s174] %v357
                %v359 = vld [vmem:[%s181 + $0xa40] sm:%s174]
                %360 = vst [vmem:[%s182 + $0x2c0] sm:%s174] %v359
                %v361 = vld [vmem:[%s181 + $0xa48] sm:%s174]
                %362 = vst [vmem:[%s182 + $0x2c8] sm:%s174] %v361
                %v363 = vld [vmem:[%s181 + $0xa50] sm:%s174]
                %364 = vst [vmem:[%s182 + $0x2d0] sm:%s174] %v363
                %v365 = vld [vmem:[%s181 + $0xa58] sm:%s174]
                %366 = vst [vmem:[%s182 + $0x2d8] sm:%s174] %v365
                %v367 = vld [vmem:[%s181 + $0xa60] sm:%s174]
                %368 = vst [vmem:[%s182 + $0x2e0] sm:%s174] %v367
                %v369 = vld [vmem:[%s181 + $0xa68] sm:%s174]
                %370 = vst [vmem:[%s182 + $0x2e8] sm:%s174] %v369
                %v371 = vld [vmem:[%s181 + $0xa70] sm:%s174]
                %372 = vst [vmem:[%s182 + $0x2f0] sm:%s174] %v371
                %v373 = vld [vmem:[%s181 + $0xa78] sm:%s174]
                %374 = vst [vmem:[%s182 + $0x2f8] sm:%s174] %v373
                %v375 = vld [vmem:[%s181 + $0xa80] sm:%s174]
                %376 = vst [vmem:[%s182 + $0x300] sm:%s174] %v375
                %v377 = vld [vmem:[%s181 + $0xa88] sm:%s174]
                %378 = vst [vmem:[%s182 + $0x308] sm:%s174] %v377
                %v379 = vld [vmem:[%s181 + $0xa90] sm:%s174]
                %380 = vst [vmem:[%s182 + $0x310] sm:%s174] %v379
                %v381 = vld [vmem:[%s181 + $0xa98] sm:%s174]
                %382 = vst [vmem:[%s182 + $0x318] sm:%s174] %v381
                %v383 = vld [vmem:[%s181 + $0xaa0] sm:%s174]
                %384 = vst [vmem:[%s182 + $0x320] sm:%s174] %v383
                %v385 = vld [vmem:[%s181 + $0xaa8] sm:%s174]
                %386 = vst [vmem:[%s182 + $0x328] sm:%s174] %v385
                %v387 = vld [vmem:[%s181 + $0xab0] sm:%s174]
                %388 = vst [vmem:[%s182 + $0x330] sm:%s174] %v387
                %v389 = vld [vmem:[%s181 + $0xab8] sm:%s174]
                %390 = vst [vmem:[%s182 + $0x338] sm:%s174] %v389
                %v391 = vld [vmem:[%s181 + $0xac0] sm:%s174]
                %392 = vst [vmem:[%s182 + $0x340] sm:%s174] %v391
                %v393 = vld [vmem:[%s181 + $0xac8] sm:%s174]
                %394 = vst [vmem:[%s182 + $0x348] sm:%s174] %v393
                %v395 = vld [vmem:[%s181 + $0xad0] sm:%s174]
                %396 = vst [vmem:[%s182 + $0x350] sm:%s174] %v395
                %v397 = vld [vmem:[%s181 + $0xad8] sm:%s174]
                %398 = vst [vmem:[%s182 + $0x358] sm:%s174] %v397
                %v399 = vld [vmem:[%s181 + $0xae0] sm:%s174]
                %400 = vst [vmem:[%s182 + $0x360] sm:%s174] %v399
                %v401 = vld [vmem:[%s181 + $0xae8] sm:%s174]
                %402 = vst [vmem:[%s182 + $0x368] sm:%s174] %v401
                %v403 = vld [vmem:[%s181 + $0xaf0] sm:%s174]
                %404 = vst [vmem:[%s182 + $0x370] sm:%s174] %v403
                %v405 = vld [vmem:[%s181 + $0xaf8] sm:%s174]
                %406 = vst [vmem:[%s182 + $0x378] sm:%s174] %v405
                %v407 = vld [vmem:[%s181 + $0xb00] sm:%s174]
                %408 = vst [vmem:[%s182 + $0x380] sm:%s174] %v407
                %v409 = vld [vmem:[%s181 + $0xb08] sm:%s174]
                %410 = vst [vmem:[%s182 + $0x388] sm:%s174] %v409
                %v411 = vld [vmem:[%s181 + $0xb10] sm:%s174]
                %412 = vst [vmem:[%s182 + $0x390] sm:%s174] %v411
                %v413 = vld [vmem:[%s181 + $0xb18] sm:%s174]
                %414 = vst [vmem:[%s182 + $0x398] sm:%s174] %v413
                %v415 = vld [vmem:[%s181 + $0xb20] sm:%s174]
                %416 = vst [vmem:[%s182 + $0x3a0] sm:%s174] %v415
                %v417 = vld [vmem:[%s181 + $0xb28] sm:%s174]
                %418 = vst [vmem:[%s182 + $0x3a8] sm:%s174] %v417
                %v419 = vld [vmem:[%s181 + $0xb30] sm:%s174]
                %420 = vst [vmem:[%s182 + $0x3b0] sm:%s174] %v419
                %v421 = vld [vmem:[%s181 + $0xb38] sm:%s174]
                %422 = vst [vmem:[%s182 + $0x3b8] sm:%s174] %v421
              $region41: #{tpu_custom_call.1} parent=35 // loop_footer
                %s180 = sadd.s32 1, %s176
              $region42: #{tpu_custom_call.1} parent=35 // loop_footer_branch
                %175 = sbr.rel target = $region38
              $region43: #{tpu_custom_call.1} parent=35 // loop_exit
                _
            $region36: #{tpu_custom_call.1} parent=27 // pred_fallthru
              _
          $region28: #{tpu_custom_call.1} parent=23 // pred_fallthru
            _
          %675 = vnop
        $region24: #{tpu_custom_call.1} parent=15 // pred_fallthru
          _
        // Predicated region
        $region59: #{tpu_custom_call.1} parent=15 // pred_check
          %p676 = pneg %p96
        $region60: #{tpu_custom_call.1} parent=15 // pred_check_branch
          %678 = sbr.rel (%p676) target = $region62
        $region61: #{tpu_custom_call.1} parent=15 // pred_region
          %s679 = smul.u32 40, %s20
          %p680 = scmp.lt.s32.totalorder %s679, 159
          %s681 = scalar_select %p680, %s679, 159
          %s682 = smul.addr %s681, 8
          %s683 = scalar_lea.vmem %s2, %s682
          %s684 = smul.u32 40, %s20
        $region62: #{tpu_custom_call.1} parent=15 // pred_fallthru
          _
      $region16: #{tpu_custom_call.1} parent=5 // pred_fallthru
        _
      %p685 = scmp.le.s32.totalorder 1, %s12
      %p686 = scmp.lt.s32.totalorder %s12, 9
      %p687 = pnand %p685, %p686
      %p688 = pneg %p687
      // Predicated region
      $region63: #{tpu_custom_call.1} parent=5 // pred_check
        _
      $region64: #{tpu_custom_call.1} parent=5 // pred_check_branch
        %690 = sbr.rel (%p687) target = $region66
      $region65: #{tpu_custom_call.1} parent=5 // pred_region
        %s691 = ssub.s32 %s12, 1
        %s692 = sand.u32 %s63, 1
        %s693 = sand.u32 %s63, 1
        %s694 = smul.addr %s693, 960
        %s695 = scalar_lea.vmem [#allocation2], %s694
        // Predicated region
        $region67: #{tpu_custom_call.1} parent=65 // pred_check
          %p696 = pneg %p76
        $region68: #{tpu_custom_call.1} parent=65 // pred_check_branch
          %698 = sbr.rel (%p696) target = $region70
        $region69: #{tpu_custom_call.1} parent=65 // pred_region
          _
        $region70: #{tpu_custom_call.1} parent=65 // pred_fallthru
          _
        %p699 = scmp.lt.s32.totalorder %s21, 1
        %s700 = scalar_select %p699, %s21, 1
        %s701 = smul.addr %s700, 2
        %s702 = smul.addr %s701, 4
        %s703 = scalar_lea.vmem %s0, %s702
        %p704 = pneg %p50
        %p705 = pneg %p47
        %s706 = sand.u32 %s63, 1
        %s707 = sand.u32 %s63, 1
        %s708 = smul.addr %s707, 960
        %s709 = scalar_lea.vmem [#allocation2], %s708
        %p710 = pneg %p76
        %p711 = pneg %p73
        %s712 = smul.u32 40, %s22
        %p713 = scmp.lt.s32.totalorder %s712, 159
        %s714 = scalar_select %p713, %s712, 159
        %s715 = smul.addr %s714, 8
        %s716 = scalar_lea.vmem %s2, %s715
        %p717 = pneg %p102
        %p718 = pneg %p99
        %p719 = pneg %p130
        %p720 = pneg %p127
        %s721 = sand.u32 %s117, 1
        %s722 = scalar_lea.sflag [#allocation4], %s721
        %s723 = sand.u32 %s117, 1
        %s724 = smul.addr %s723, 640
        %s725 = scalar_lea.vmem [#allocation3], %s724
        %p726 = scmp.lt.s32.totalorder %s21, 1
        %s727 = scalar_select %p726, %s21, 1
        %s728 = smul.addr %s727, 2
        %s729 = smul.addr %s728, 4
        %s730 = scalar_lea.vmem %s0, %s729
        %s731 = smul.u32 40, %s22
        %s732 = smul.u32 40, %s22
        %p733 = scmp.lt.s32.totalorder %s732, 159
        %s734 = scalar_select %p733, %s732, 159
        %s735 = smul.addr %s734, 8
        %s736 = scalar_lea.vmem %s2, %s735
        %s737 = smul.u32 40, %s22
        %s738 = smul.u32 40, %s22
        %v739 = vld [vmem:[%s730] sm:$0x77]
        %v740 = vld [vmem:[%s736] sm:$0xff]
        %v741 = vld [vmem:[%s736 + $0x8] sm:$0xff]
        %v742 = vld [vmem:[%s736 + $0x10] sm:$0xff]
        %v743 = vld [vmem:[%s736 + $0x18] sm:$0xff]
        %v744 = vld [vmem:[%s736 + $0x20] sm:$0xff]
        %v745 = vld [vmem:[%s736 + $0x28] sm:$0xff]
        %v746 = vld [vmem:[%s736 + $0x30] sm:$0xff]
        %v747 = vld [vmem:[%s736 + $0x38] sm:$0xff]
        %v748 = vld [vmem:[%s736 + $0x40] sm:$0xff]
        %v749 = vld [vmem:[%s736 + $0x48] sm:$0xff]
        %v750 = vld [vmem:[%s736 + $0x50] sm:$0xff]
        %v751 = vld [vmem:[%s736 + $0x58] sm:$0xff]
        %v752 = vld [vmem:[%s736 + $0x60] sm:$0xff]
        %v753 = vld [vmem:[%s736 + $0x68] sm:$0xff]
        %v754 = vld [vmem:[%s736 + $0x70] sm:$0xff]
        %v755 = vld [vmem:[%s736 + $0x78] sm:$0xff]
        %v756 = vld [vmem:[%s736 + $0x80] sm:$0xff]
        %v757 = vld [vmem:[%s736 + $0x88] sm:$0xff]
        %v758 = vld [vmem:[%s736 + $0x90] sm:$0xff]
        %v759 = vld [vmem:[%s736 + $0x98] sm:$0xff]
        %v760 = vld [vmem:[%s736 + $0xa0] sm:$0xff]
        %v761 = vld [vmem:[%s736 + $0xa8] sm:$0xff]
        %v762 = vld [vmem:[%s736 + $0xb0] sm:$0xff]
        %v763 = vld [vmem:[%s736 + $0xb8] sm:$0xff]
        %v764 = vld [vmem:[%s736 + $0xc0] sm:$0xff]
        %v765 = vld [vmem:[%s736 + $0xc8] sm:$0xff]
        %v766 = vld [vmem:[%s736 + $0xd0] sm:$0xff]
        %v767 = vld [vmem:[%s736 + $0xd8] sm:$0xff]
        %v768 = vld [vmem:[%s736 + $0xe0] sm:$0xff]
        %v769 = vld [vmem:[%s736 + $0xe8] sm:$0xff]
        %v770 = vld [vmem:[%s736 + $0xf0] sm:$0xff]
        %v771 = vld [vmem:[%s736 + $0xf8] sm:$0xff]
        %v772 = vld [vmem:[%s736 + $0x100] sm:$0xff]
        %v773 = vld [vmem:[%s736 + $0x108] sm:$0xff]
        %v774 = vld [vmem:[%s736 + $0x110] sm:$0xff]
        %v775 = vld [vmem:[%s736 + $0x118] sm:$0xff]
        %v776 = vld [vmem:[%s736 + $0x120] sm:$0xff]
        %v777 = vld [vmem:[%s736 + $0x128] sm:$0xff]
        %v778 = vld [vmem:[%s736 + $0x130] sm:$0xff]
        %v779 = vld [vmem:[%s736 + $0x138] sm:$0xff]
        %v780 = vld [vmem:[%s695] sm:$0xff]
        %v781 = vld [vmem:[%s695 + $0x8] sm:$0xff]
        %v782 = vld [vmem:[%s695 + $0x10] sm:$0xff]
        %v783 = vld [vmem:[%s695 + $0x18] sm:$0xff]
        %v784 = vld [vmem:[%s695 + $0x20] sm:$0xff]
        %v785 = vld [vmem:[%s695 + $0x28] sm:$0xff]
        %v786 = vld [vmem:[%s695 + $0x30] sm:$0xff]
        %v787 = vld [vmem:[%s695 + $0x38] sm:$0xff]
        %v788 = vld [vmem:[%s695 + $0x40] sm:$0xff]
        %v789 = vld [vmem:[%s695 + $0x48] sm:$0xff]
        %v790 = vld [vmem:[%s695 + $0x50] sm:$0xff]
        %v791 = vld [vmem:[%s695 + $0x58] sm:$0xff]
        %v792 = vld [vmem:[%s695 + $0x60] sm:$0xff]
        %v793 = vld [vmem:[%s695 + $0x68] sm:$0xff]
        %v794 = vld [vmem:[%s695 + $0x70] sm:$0xff]
        %v795 = vld [vmem:[%s695 + $0x78] sm:$0xff]
        %v796 = vld [vmem:[%s695 + $0x80] sm:$0xff]
        %v797 = vld [vmem:[%s695 + $0x88] sm:$0xff]
        %v798 = vld [vmem:[%s695 + $0x90] sm:$0xff]
        %v799 = vld [vmem:[%s695 + $0x98] sm:$0xff]
        %v800 = vld [vmem:[%s695 + $0xa0] sm:$0xff]
        %v801 = vld [vmem:[%s695 + $0xa8] sm:$0xff]
        %v802 = vld [vmem:[%s695 + $0xb0] sm:$0xff]
        %v803 = vld [vmem:[%s695 + $0xb8] sm:$0xff]
        %v804 = vld [vmem:[%s695 + $0xc0] sm:$0xff]
        %v805 = vld [vmem:[%s695 + $0xc8] sm:$0xff]
        %v806 = vld [vmem:[%s695 + $0xd0] sm:$0xff]
        %v807 = vld [vmem:[%s695 + $0xd8] sm:$0xff]
        %v808 = vld [vmem:[%s695 + $0xe0] sm:$0xff]
        %v809 = vld [vmem:[%s695 + $0xe8] sm:$0xff]
        %v810 = vld [vmem:[%s695 + $0xf0] sm:$0xff]
        %v811 = vld [vmem:[%s695 + $0xf8] sm:$0xff]
        %v812 = vld [vmem:[%s695 + $0x100] sm:$0xff]
        %v813 = vld [vmem:[%s695 + $0x108] sm:$0xff]
        %v814 = vld [vmem:[%s695 + $0x110] sm:$0xff]
        %v815 = vld [vmem:[%s695 + $0x118] sm:$0xff]
        %v816 = vld [vmem:[%s695 + $0x120] sm:$0xff]
        %v817 = vld [vmem:[%s695 + $0x128] sm:$0xff]
        %v818 = vld [vmem:[%s695 + $0x130] sm:$0xff]
        %v819 = vld [vmem:[%s695 + $0x138] sm:$0xff]
        %821 = vset.pattern.permute.xlu0 0
        %822 = vperm.xlu0 %821, %v780
        %v823 = vpop.permute.xlu0 %822
        %826 = vset.pattern.permute.xlu0 0
        %827 = vperm.xlu0 %826, %v781
        %v828 = vpop.permute.xlu0 %827
        %831 = vset.pattern.permute.xlu0 0
        %832 = vperm.xlu0 %831, %v782
        %v833 = vpop.permute.xlu0 %832
        %836 = vset.pattern.permute.xlu0 0
        %837 = vperm.xlu0 %836, %v783
        %v838 = vpop.permute.xlu0 %837
        %841 = vset.pattern.permute.xlu0 0
        %842 = vperm.xlu0 %841, %v784
        %v843 = vpop.permute.xlu0 %842
        %846 = vset.pattern.permute.xlu0 0
        %847 = vperm.xlu0 %846, %v785
        %v848 = vpop.permute.xlu0 %847
        %851 = vset.pattern.permute.xlu0 0
        %852 = vperm.xlu0 %851, %v786
        %v853 = vpop.permute.xlu0 %852
        %856 = vset.pattern.permute.xlu0 0
        %857 = vperm.xlu0 %856, %v787
        %v858 = vpop.permute.xlu0 %857
        %861 = vset.pattern.permute.xlu0 0
        %862 = vperm.xlu0 %861, %v788
        %v863 = vpop.permute.xlu0 %862
        %866 = vset.pattern.permute.xlu0 0
        %867 = vperm.xlu0 %866, %v789
        %v868 = vpop.permute.xlu0 %867
        %871 = vset.pattern.permute.xlu0 0
        %872 = vperm.xlu0 %871, %v790
        %v873 = vpop.permute.xlu0 %872
        %876 = vset.pattern.permute.xlu0 0
        %877 = vperm.xlu0 %876, %v791
        %v878 = vpop.permute.xlu0 %877
        %881 = vset.pattern.permute.xlu0 0
        %882 = vperm.xlu0 %881, %v792
        %v883 = vpop.permute.xlu0 %882
        %886 = vset.pattern.permute.xlu0 0
        %887 = vperm.xlu0 %886, %v793
        %v888 = vpop.permute.xlu0 %887
        %891 = vset.pattern.permute.xlu0 0
        %892 = vperm.xlu0 %891, %v794
        %v893 = vpop.permute.xlu0 %892
        %896 = vset.pattern.permute.xlu0 0
        %897 = vperm.xlu0 %896, %v795
        %v898 = vpop.permute.xlu0 %897
        %901 = vset.pattern.permute.xlu0 0
        %902 = vperm.xlu0 %901, %v796
        %v903 = vpop.permute.xlu0 %902
        %906 = vset.pattern.permute.xlu0 0
        %907 = vperm.xlu0 %906, %v797
        %v908 = vpop.permute.xlu0 %907
        %911 = vset.pattern.permute.xlu0 0
        %912 = vperm.xlu0 %911, %v798
        %v913 = vpop.permute.xlu0 %912
        %916 = vset.pattern.permute.xlu0 0
        %917 = vperm.xlu0 %916, %v799
        %v918 = vpop.permute.xlu0 %917
        %921 = vset.pattern.permute.xlu0 0
        %922 = vperm.xlu0 %921, %v800
        %v923 = vpop.permute.xlu0 %922
        %926 = vset.pattern.permute.xlu0 0
        %927 = vperm.xlu0 %926, %v801
        %v928 = vpop.permute.xlu0 %927
        %931 = vset.pattern.permute.xlu0 0
        %932 = vperm.xlu0 %931, %v802
        %v933 = vpop.permute.xlu0 %932
        %936 = vset.pattern.permute.xlu0 0
        %937 = vperm.xlu0 %936, %v803
        %v938 = vpop.permute.xlu0 %937
        %941 = vset.pattern.permute.xlu0 0
        %942 = vperm.xlu0 %941, %v804
        %v943 = vpop.permute.xlu0 %942
        %946 = vset.pattern.permute.xlu0 0
        %947 = vperm.xlu0 %946, %v805
        %v948 = vpop.permute.xlu0 %947
        %951 = vset.pattern.permute.xlu0 0
        %952 = vperm.xlu0 %951, %v806
        %v953 = vpop.permute.xlu0 %952
        %956 = vset.pattern.permute.xlu0 0
        %957 = vperm.xlu0 %956, %v807
        %v958 = vpop.permute.xlu0 %957
        %961 = vset.pattern.permute.xlu0 0
        %962 = vperm.xlu0 %961, %v808
        %v963 = vpop.permute.xlu0 %962
        %966 = vset.pattern.permute.xlu0 0
        %967 = vperm.xlu0 %966, %v809
        %v968 = vpop.permute.xlu0 %967
        %971 = vset.pattern.permute.xlu0 0
        %972 = vperm.xlu0 %971, %v810
        %v973 = vpop.permute.xlu0 %972
        %976 = vset.pattern.permute.xlu0 0
        %977 = vperm.xlu0 %976, %v811
        %v978 = vpop.permute.xlu0 %977
        %981 = vset.pattern.permute.xlu0 0
        %982 = vperm.xlu0 %981, %v812
        %v983 = vpop.permute.xlu0 %982
        %986 = vset.pattern.permute.xlu0 0
        %987 = vperm.xlu0 %986, %v813
        %v988 = vpop.permute.xlu0 %987
        %991 = vset.pattern.permute.xlu0 0
        %992 = vperm.xlu0 %991, %v814
        %v993 = vpop.permute.xlu0 %992
        %996 = vset.pattern.permute.xlu0 0
        %997 = vperm.xlu0 %996, %v815
        %v998 = vpop.permute.xlu0 %997
        %1001 = vset.pattern.permute.xlu0 0
        %1002 = vperm.xlu0 %1001, %v816
        %v1003 = vpop.permute.xlu0 %1002
        %1006 = vset.pattern.permute.xlu0 0
        %1007 = vperm.xlu0 %1006, %v817
        %v1008 = vpop.permute.xlu0 %1007
        %1011 = vset.pattern.permute.xlu0 0
        %1012 = vperm.xlu0 %1011, %v818
        %v1013 = vpop.permute.xlu0 %1012
        %1016 = vset.pattern.permute.xlu0 0
        %1017 = vperm.xlu0 %1016, %v819
        %v1018 = vpop.permute.xlu0 %1017
        %v1021 = vlaneseq
        %v1022 = vshrl.u32 %v1021, 7
        %v1023 = vsub.s32 0, %v1022
        %v1024 = vrot.slane %v739, %v1023
        %v1025 = vlaneseq
        %v1026 = vshrl.u32 %v1025, 7
        %v1027 = vsub.s32 4, %v1026
        %v1028 = vrot.slane %v739, %v1027
        %v1031 = vlaneseq
        %v1032 = vshrl.u32 %v1031, 7
        %v1033 = vsub.s32 0, %v1032
        %v1034 = vrot.slane %v1024, %v1033
        %v1035 = vlaneseq
        %v1036 = vshrl.u32 %v1035, 7
        %v1037 = vsub.s32 0, %v1036
        %v1038 = vrot.slane %v1028, %v1037
        %v1039 = vmul.f32 %v823, %v1034
        %v1040 = vmul.f32 %v823, %v1038
        %v1041 = vmul.f32 %v828, %v1034
        %v1042 = vmul.f32 %v828, %v1038
        %v1043 = vmul.f32 %v833, %v1034
        %v1044 = vmul.f32 %v833, %v1038
        %v1045 = vmul.f32 %v838, %v1034
        %v1046 = vmul.f32 %v838, %v1038
        %v1047 = vmul.f32 %v843, %v1034
        %v1048 = vmul.f32 %v843, %v1038
        %v1049 = vmul.f32 %v848, %v1034
        %v1050 = vmul.f32 %v848, %v1038
        %v1051 = vmul.f32 %v853, %v1034
        %v1052 = vmul.f32 %v853, %v1038
        %v1053 = vmul.f32 %v858, %v1034
        %v1054 = vmul.f32 %v858, %v1038
        %v1055 = vmul.f32 %v863, %v1034
        %v1056 = vmul.f32 %v863, %v1038
        %v1057 = vmul.f32 %v868, %v1034
        %v1058 = vmul.f32 %v868, %v1038
        %v1059 = vmul.f32 %v873, %v1034
        %v1060 = vmul.f32 %v873, %v1038
        %v1061 = vmul.f32 %v878, %v1034
        %v1062 = vmul.f32 %v878, %v1038
        %v1063 = vmul.f32 %v883, %v1034
        %v1064 = vmul.f32 %v883, %v1038
        %v1065 = vmul.f32 %v888, %v1034
        %v1066 = vmul.f32 %v888, %v1038
        %v1067 = vmul.f32 %v893, %v1034
        %v1068 = vmul.f32 %v893, %v1038
        %v1069 = vmul.f32 %v898, %v1034
        %v1070 = vmul.f32 %v898, %v1038
        %v1071 = vmul.f32 %v903, %v1034
        %v1072 = vmul.f32 %v903, %v1038
        %v1073 = vmul.f32 %v908, %v1034
        %v1074 = vmul.f32 %v908, %v1038
        %v1075 = vmul.f32 %v913, %v1034
        %v1076 = vmul.f32 %v913, %v1038
        %v1077 = vmul.f32 %v918, %v1034
        %v1078 = vmul.f32 %v918, %v1038
        %v1079 = vmul.f32 %v923, %v1034
        %v1080 = vmul.f32 %v923, %v1038
        %v1081 = vmul.f32 %v928, %v1034
        %v1082 = vmul.f32 %v928, %v1038
        %v1083 = vmul.f32 %v933, %v1034
        %v1084 = vmul.f32 %v933, %v1038
        %v1085 = vmul.f32 %v938, %v1034
        %v1086 = vmul.f32 %v938, %v1038
        %v1087 = vmul.f32 %v943, %v1034
        %v1088 = vmul.f32 %v943, %v1038
        %v1089 = vmul.f32 %v948, %v1034
        %v1090 = vmul.f32 %v948, %v1038
        %v1091 = vmul.f32 %v953, %v1034
        %v1092 = vmul.f32 %v953, %v1038
        %v1093 = vmul.f32 %v958, %v1034
        %v1094 = vmul.f32 %v958, %v1038
        %v1095 = vmul.f32 %v963, %v1034
        %v1096 = vmul.f32 %v963, %v1038
        %v1097 = vmul.f32 %v968, %v1034
        %v1098 = vmul.f32 %v968, %v1038
        %v1099 = vmul.f32 %v973, %v1034
        %v1100 = vmul.f32 %v973, %v1038
        %v1101 = vmul.f32 %v978, %v1034
        %v1102 = vmul.f32 %v978, %v1038
        %v1103 = vmul.f32 %v983, %v1034
        %v1104 = vmul.f32 %v983, %v1038
        %v1105 = vmul.f32 %v988, %v1034
        %v1106 = vmul.f32 %v988, %v1038
        %v1107 = vmul.f32 %v993, %v1034
        %v1108 = vmul.f32 %v993, %v1038
        %v1109 = vmul.f32 %v998, %v1034
        %v1110 = vmul.f32 %v998, %v1038
        %v1111 = vmul.f32 %v1003, %v1034
        %v1112 = vmul.f32 %v1003, %v1038
        %v1113 = vmul.f32 %v1008, %v1034
        %v1114 = vmul.f32 %v1008, %v1038
        %v1115 = vmul.f32 %v1013, %v1034
        %v1116 = vmul.f32 %v1013, %v1038
        %v1117 = vmul.f32 %v1018, %v1034
        %v1118 = vmul.f32 %v1018, %v1038
        %1120 = vset.pattern.permute.xlu0 0
        %1121 = vperm.xlu0 %1120, %v740
        %v1122 = vpop.permute.xlu0 %1121
        %1125 = vset.pattern.permute.xlu0 0
        %1126 = vperm.xlu0 %1125, %v741
        %v1127 = vpop.permute.xlu0 %1126
        %1130 = vset.pattern.permute.xlu0 0
        %1131 = vperm.xlu0 %1130, %v742
        %v1132 = vpop.permute.xlu0 %1131
        %1135 = vset.pattern.permute.xlu0 0
        %1136 = vperm.xlu0 %1135, %v743
        %v1137 = vpop.permute.xlu0 %1136
        %1140 = vset.pattern.permute.xlu0 0
        %1141 = vperm.xlu0 %1140, %v744
        %v1142 = vpop.permute.xlu0 %1141
        %1145 = vset.pattern.permute.xlu0 0
        %1146 = vperm.xlu0 %1145, %v745
        %v1147 = vpop.permute.xlu0 %1146
        %1150 = vset.pattern.permute.xlu0 0
        %1151 = vperm.xlu0 %1150, %v746
        %v1152 = vpop.permute.xlu0 %1151
        %1155 = vset.pattern.permute.xlu0 0
        %1156 = vperm.xlu0 %1155, %v747
        %v1157 = vpop.permute.xlu0 %1156
        %1160 = vset.pattern.permute.xlu0 0
        %1161 = vperm.xlu0 %1160, %v748
        %v1162 = vpop.permute.xlu0 %1161
        %1165 = vset.pattern.permute.xlu0 0
        %1166 = vperm.xlu0 %1165, %v749
        %v1167 = vpop.permute.xlu0 %1166
        %1170 = vset.pattern.permute.xlu0 0
        %1171 = vperm.xlu0 %1170, %v750
        %v1172 = vpop.permute.xlu0 %1171
        %1175 = vset.pattern.permute.xlu0 0
        %1176 = vperm.xlu0 %1175, %v751
        %v1177 = vpop.permute.xlu0 %1176
        %1180 = vset.pattern.permute.xlu0 0
        %1181 = vperm.xlu0 %1180, %v752
        %v1182 = vpop.permute.xlu0 %1181
        %1185 = vset.pattern.permute.xlu0 0
        %1186 = vperm.xlu0 %1185, %v753
        %v1187 = vpop.permute.xlu0 %1186
        %1190 = vset.pattern.permute.xlu0 0
        %1191 = vperm.xlu0 %1190, %v754
        %v1192 = vpop.permute.xlu0 %1191
        %1195 = vset.pattern.permute.xlu0 0
        %1196 = vperm.xlu0 %1195, %v755
        %v1197 = vpop.permute.xlu0 %1196
        %1200 = vset.pattern.permute.xlu0 0
        %1201 = vperm.xlu0 %1200, %v756
        %v1202 = vpop.permute.xlu0 %1201
        %1205 = vset.pattern.permute.xlu0 0
        %1206 = vperm.xlu0 %1205, %v757
        %v1207 = vpop.permute.xlu0 %1206
        %1210 = vset.pattern.permute.xlu0 0
        %1211 = vperm.xlu0 %1210, %v758
        %v1212 = vpop.permute.xlu0 %1211
        %1215 = vset.pattern.permute.xlu0 0
        %1216 = vperm.xlu0 %1215, %v759
        %v1217 = vpop.permute.xlu0 %1216
        %1220 = vset.pattern.permute.xlu0 0
        %1221 = vperm.xlu0 %1220, %v760
        %v1222 = vpop.permute.xlu0 %1221
        %1225 = vset.pattern.permute.xlu0 0
        %1226 = vperm.xlu0 %1225, %v761
        %v1227 = vpop.permute.xlu0 %1226
        %1230 = vset.pattern.permute.xlu0 0
        %1231 = vperm.xlu0 %1230, %v762
        %v1232 = vpop.permute.xlu0 %1231
        %1235 = vset.pattern.permute.xlu0 0
        %1236 = vperm.xlu0 %1235, %v763
        %v1237 = vpop.permute.xlu0 %1236
        %1240 = vset.pattern.permute.xlu0 0
        %1241 = vperm.xlu0 %1240, %v764
        %v1242 = vpop.permute.xlu0 %1241
        %1245 = vset.pattern.permute.xlu0 0
        %1246 = vperm.xlu0 %1245, %v765
        %v1247 = vpop.permute.xlu0 %1246
        %1250 = vset.pattern.permute.xlu0 0
        %1251 = vperm.xlu0 %1250, %v766
        %v1252 = vpop.permute.xlu0 %1251
        %1255 = vset.pattern.permute.xlu0 0
        %1256 = vperm.xlu0 %1255, %v767
        %v1257 = vpop.permute.xlu0 %1256
        %1260 = vset.pattern.permute.xlu0 0
        %1261 = vperm.xlu0 %1260, %v768
        %v1262 = vpop.permute.xlu0 %1261
        %1265 = vset.pattern.permute.xlu0 0
        %1266 = vperm.xlu0 %1265, %v769
        %v1267 = vpop.permute.xlu0 %1266
        %1270 = vset.pattern.permute.xlu0 0
        %1271 = vperm.xlu0 %1270, %v770
        %v1272 = vpop.permute.xlu0 %1271
        %1275 = vset.pattern.permute.xlu0 0
        %1276 = vperm.xlu0 %1275, %v771
        %v1277 = vpop.permute.xlu0 %1276
        %1280 = vset.pattern.permute.xlu0 0
        %1281 = vperm.xlu0 %1280, %v772
        %v1282 = vpop.permute.xlu0 %1281
        %1285 = vset.pattern.permute.xlu0 0
        %1286 = vperm.xlu0 %1285, %v773
        %v1287 = vpop.permute.xlu0 %1286
        %1290 = vset.pattern.permute.xlu0 0
        %1291 = vperm.xlu0 %1290, %v774
        %v1292 = vpop.permute.xlu0 %1291
        %1295 = vset.pattern.permute.xlu0 0
        %1296 = vperm.xlu0 %1295, %v775
        %v1297 = vpop.permute.xlu0 %1296
        %1300 = vset.pattern.permute.xlu0 0
        %1301 = vperm.xlu0 %1300, %v776
        %v1302 = vpop.permute.xlu0 %1301
        %1305 = vset.pattern.permute.xlu0 0
        %1306 = vperm.xlu0 %1305, %v777
        %v1307 = vpop.permute.xlu0 %1306
        %1310 = vset.pattern.permute.xlu0 0
        %1311 = vperm.xlu0 %1310, %v778
        %v1312 = vpop.permute.xlu0 %1311
        %1315 = vset.pattern.permute.xlu0 0
        %1316 = vperm.xlu0 %1315, %v779
        %v1317 = vpop.permute.xlu0 %1316
        %v1319 = vadd.f32 %v1122, %v1039
        %v1320 = vadd.f32 %v1122, %v1040
        %v1321 = vadd.f32 %v1127, %v1041
        %v1322 = vadd.f32 %v1127, %v1042
        %v1323 = vadd.f32 %v1132, %v1043
        %v1324 = vadd.f32 %v1132, %v1044
        %v1325 = vadd.f32 %v1137, %v1045
        %v1326 = vadd.f32 %v1137, %v1046
        %v1327 = vadd.f32 %v1142, %v1047
        %v1328 = vadd.f32 %v1142, %v1048
        %v1329 = vadd.f32 %v1147, %v1049
        %v1330 = vadd.f32 %v1147, %v1050
        %v1331 = vadd.f32 %v1152, %v1051
        %v1332 = vadd.f32 %v1152, %v1052
        %v1333 = vadd.f32 %v1157, %v1053
        %v1334 = vadd.f32 %v1157, %v1054
        %v1335 = vadd.f32 %v1162, %v1055
        %v1336 = vadd.f32 %v1162, %v1056
        %v1337 = vadd.f32 %v1167, %v1057
        %v1338 = vadd.f32 %v1167, %v1058
        %v1339 = vadd.f32 %v1172, %v1059
        %v1340 = vadd.f32 %v1172, %v1060
        %v1341 = vadd.f32 %v1177, %v1061
        %v1342 = vadd.f32 %v1177, %v1062
        %v1343 = vadd.f32 %v1182, %v1063
        %v1344 = vadd.f32 %v1182, %v1064
        %v1345 = vadd.f32 %v1187, %v1065
        %v1346 = vadd.f32 %v1187, %v1066
        %v1347 = vadd.f32 %v1192, %v1067
        %v1348 = vadd.f32 %v1192, %v1068
        %v1349 = vadd.f32 %v1197, %v1069
        %v1350 = vadd.f32 %v1197, %v1070
        %v1351 = vadd.f32 %v1202, %v1071
        %v1352 = vadd.f32 %v1202, %v1072
        %v1353 = vadd.f32 %v1207, %v1073
        %v1354 = vadd.f32 %v1207, %v1074
        %v1355 = vadd.f32 %v1212, %v1075
        %v1356 = vadd.f32 %v1212, %v1076
        %v1357 = vadd.f32 %v1217, %v1077
        %v1358 = vadd.f32 %v1217, %v1078
        %v1359 = vadd.f32 %v1222, %v1079
        %v1360 = vadd.f32 %v1222, %v1080
        %v1361 = vadd.f32 %v1227, %v1081
        %v1362 = vadd.f32 %v1227, %v1082
        %v1363 = vadd.f32 %v1232, %v1083
        %v1364 = vadd.f32 %v1232, %v1084
        %v1365 = vadd.f32 %v1237, %v1085
        %v1366 = vadd.f32 %v1237, %v1086
        %v1367 = vadd.f32 %v1242, %v1087
        %v1368 = vadd.f32 %v1242, %v1088
        %v1369 = vadd.f32 %v1247, %v1089
        %v1370 = vadd.f32 %v1247, %v1090
        %v1371 = vadd.f32 %v1252, %v1091
        %v1372 = vadd.f32 %v1252, %v1092
        %v1373 = vadd.f32 %v1257, %v1093
        %v1374 = vadd.f32 %v1257, %v1094
        %v1375 = vadd.f32 %v1262, %v1095
        %v1376 = vadd.f32 %v1262, %v1096
        %v1377 = vadd.f32 %v1267, %v1097
        %v1378 = vadd.f32 %v1267, %v1098
        %v1379 = vadd.f32 %v1272, %v1099
        %v1380 = vadd.f32 %v1272, %v1100
        %v1381 = vadd.f32 %v1277, %v1101
        %v1382 = vadd.f32 %v1277, %v1102
        %v1383 = vadd.f32 %v1282, %v1103
        %v1384 = vadd.f32 %v1282, %v1104
        %v1385 = vadd.f32 %v1287, %v1105
        %v1386 = vadd.f32 %v1287, %v1106
        %v1387 = vadd.f32 %v1292, %v1107
        %v1388 = vadd.f32 %v1292, %v1108
        %v1389 = vadd.f32 %v1297, %v1109
        %v1390 = vadd.f32 %v1297, %v1110
        %v1391 = vadd.f32 %v1302, %v1111
        %v1392 = vadd.f32 %v1302, %v1112
        %v1393 = vadd.f32 %v1307, %v1113
        %v1394 = vadd.f32 %v1307, %v1114
        %v1395 = vadd.f32 %v1312, %v1115
        %v1396 = vadd.f32 %v1312, %v1116
        %v1397 = vadd.f32 %v1317, %v1117
        %v1398 = vadd.f32 %v1317, %v1118
        %s1399 = scalar_lea.vmem %s695, 320 [#allocation2]
        %v1400 = vld [vmem:[%s1399] sm:$0xff]
        %v1401 = vld [vmem:[%s1399 + $0x8] sm:$0xff]
        %v1402 = vld [vmem:[%s1399 + $0x10] sm:$0xff]
        %v1403 = vld [vmem:[%s1399 + $0x18] sm:$0xff]
        %v1404 = vld [vmem:[%s1399 + $0x20] sm:$0xff]
        %v1405 = vld [vmem:[%s1399 + $0x28] sm:$0xff]
        %v1406 = vld [vmem:[%s1399 + $0x30] sm:$0xff]
        %v1407 = vld [vmem:[%s1399 + $0x38] sm:$0xff]
        %v1408 = vld [vmem:[%s1399 + $0x40] sm:$0xff]
        %v1409 = vld [vmem:[%s1399 + $0x48] sm:$0xff]
        %v1410 = vld [vmem:[%s1399 + $0x50] sm:$0xff]
        %v1411 = vld [vmem:[%s1399 + $0x58] sm:$0xff]
        %v1412 = vld [vmem:[%s1399 + $0x60] sm:$0xff]
        %v1413 = vld [vmem:[%s1399 + $0x68] sm:$0xff]
        %v1414 = vld [vmem:[%s1399 + $0x70] sm:$0xff]
        %v1415 = vld [vmem:[%s1399 + $0x78] sm:$0xff]
        %v1416 = vld [vmem:[%s1399 + $0x80] sm:$0xff]
        %v1417 = vld [vmem:[%s1399 + $0x88] sm:$0xff]
        %v1418 = vld [vmem:[%s1399 + $0x90] sm:$0xff]
        %v1419 = vld [vmem:[%s1399 + $0x98] sm:$0xff]
        %v1420 = vld [vmem:[%s1399 + $0xa0] sm:$0xff]
        %v1421 = vld [vmem:[%s1399 + $0xa8] sm:$0xff]
        %v1422 = vld [vmem:[%s1399 + $0xb0] sm:$0xff]
        %v1423 = vld [vmem:[%s1399 + $0xb8] sm:$0xff]
        %v1424 = vld [vmem:[%s1399 + $0xc0] sm:$0xff]
        %v1425 = vld [vmem:[%s1399 + $0xc8] sm:$0xff]
        %v1426 = vld [vmem:[%s1399 + $0xd0] sm:$0xff]
        %v1427 = vld [vmem:[%s1399 + $0xd8] sm:$0xff]
        %v1428 = vld [vmem:[%s1399 + $0xe0] sm:$0xff]
        %v1429 = vld [vmem:[%s1399 + $0xe8] sm:$0xff]
        %v1430 = vld [vmem:[%s1399 + $0xf0] sm:$0xff]
        %v1431 = vld [vmem:[%s1399 + $0xf8] sm:$0xff]
        %v1432 = vld [vmem:[%s1399 + $0x100] sm:$0xff]
        %v1433 = vld [vmem:[%s1399 + $0x108] sm:$0xff]
        %v1434 = vld [vmem:[%s1399 + $0x110] sm:$0xff]
        %v1435 = vld [vmem:[%s1399 + $0x118] sm:$0xff]
        %v1436 = vld [vmem:[%s1399 + $0x120] sm:$0xff]
        %v1437 = vld [vmem:[%s1399 + $0x128] sm:$0xff]
        %v1438 = vld [vmem:[%s1399 + $0x130] sm:$0xff]
        %v1439 = vld [vmem:[%s1399 + $0x138] sm:$0xff]
        %1441 = vset.pattern.permute.xlu0 0
        %1442 = vperm.xlu0 %1441, %v1400
        %v1443 = vpop.permute.xlu0 %1442
        %1446 = vset.pattern.permute.xlu0 0
        %1447 = vperm.xlu0 %1446, %v1401
        %v1448 = vpop.permute.xlu0 %1447
        %1451 = vset.pattern.permute.xlu0 0
        %1452 = vperm.xlu0 %1451, %v1402
        %v1453 = vpop.permute.xlu0 %1452
        %1456 = vset.pattern.permute.xlu0 0
        %1457 = vperm.xlu0 %1456, %v1403
        %v1458 = vpop.permute.xlu0 %1457
        %1461 = vset.pattern.permute.xlu0 0
        %1462 = vperm.xlu0 %1461, %v1404
        %v1463 = vpop.permute.xlu0 %1462
        %1466 = vset.pattern.permute.xlu0 0
        %1467 = vperm.xlu0 %1466, %v1405
        %v1468 = vpop.permute.xlu0 %1467
        %1471 = vset.pattern.permute.xlu0 0
        %1472 = vperm.xlu0 %1471, %v1406
        %v1473 = vpop.permute.xlu0 %1472
        %1476 = vset.pattern.permute.xlu0 0
        %1477 = vperm.xlu0 %1476, %v1407
        %v1478 = vpop.permute.xlu0 %1477
        %1481 = vset.pattern.permute.xlu0 0
        %1482 = vperm.xlu0 %1481, %v1408
        %v1483 = vpop.permute.xlu0 %1482
        %1486 = vset.pattern.permute.xlu0 0
        %1487 = vperm.xlu0 %1486, %v1409
        %v1488 = vpop.permute.xlu0 %1487
        %1491 = vset.pattern.permute.xlu0 0
        %1492 = vperm.xlu0 %1491, %v1410
        %v1493 = vpop.permute.xlu0 %1492
        %1496 = vset.pattern.permute.xlu0 0
        %1497 = vperm.xlu0 %1496, %v1411
        %v1498 = vpop.permute.xlu0 %1497
        %1501 = vset.pattern.permute.xlu0 0
        %1502 = vperm.xlu0 %1501, %v1412
        %v1503 = vpop.permute.xlu0 %1502
        %1506 = vset.pattern.permute.xlu0 0
        %1507 = vperm.xlu0 %1506, %v1413
        %v1508 = vpop.permute.xlu0 %1507
        %1511 = vset.pattern.permute.xlu0 0
        %1512 = vperm.xlu0 %1511, %v1414
        %v1513 = vpop.permute.xlu0 %1512
        %1516 = vset.pattern.permute.xlu0 0
        %1517 = vperm.xlu0 %1516, %v1415
        %v1518 = vpop.permute.xlu0 %1517
        %1521 = vset.pattern.permute.xlu0 0
        %1522 = vperm.xlu0 %1521, %v1416
        %v1523 = vpop.permute.xlu0 %1522
        %1526 = vset.pattern.permute.xlu0 0
        %1527 = vperm.xlu0 %1526, %v1417
        %v1528 = vpop.permute.xlu0 %1527
        %1531 = vset.pattern.permute.xlu0 0
        %1532 = vperm.xlu0 %1531, %v1418
        %v1533 = vpop.permute.xlu0 %1532
        %1536 = vset.pattern.permute.xlu0 0
        %1537 = vperm.xlu0 %1536, %v1419
        %v1538 = vpop.permute.xlu0 %1537
        %1541 = vset.pattern.permute.xlu0 0
        %1542 = vperm.xlu0 %1541, %v1420
        %v1543 = vpop.permute.xlu0 %1542
        %1546 = vset.pattern.permute.xlu0 0
        %1547 = vperm.xlu0 %1546, %v1421
        %v1548 = vpop.permute.xlu0 %1547
        %1551 = vset.pattern.permute.xlu0 0
        %1552 = vperm.xlu0 %1551, %v1422
        %v1553 = vpop.permute.xlu0 %1552
        %1556 = vset.pattern.permute.xlu0 0
        %1557 = vperm.xlu0 %1556, %v1423
        %v1558 = vpop.permute.xlu0 %1557
        %1561 = vset.pattern.permute.xlu0 0
        %1562 = vperm.xlu0 %1561, %v1424
        %v1563 = vpop.permute.xlu0 %1562
        %1566 = vset.pattern.permute.xlu0 0
        %1567 = vperm.xlu0 %1566, %v1425
        %v1568 = vpop.permute.xlu0 %1567
        %1571 = vset.pattern.permute.xlu0 0
        %1572 = vperm.xlu0 %1571, %v1426
        %v1573 = vpop.permute.xlu0 %1572
        %1576 = vset.pattern.permute.xlu0 0
        %1577 = vperm.xlu0 %1576, %v1427
        %v1578 = vpop.permute.xlu0 %1577
        %1581 = vset.pattern.permute.xlu0 0
        %1582 = vperm.xlu0 %1581, %v1428
        %v1583 = vpop.permute.xlu0 %1582
        %1586 = vset.pattern.permute.xlu0 0
        %1587 = vperm.xlu0 %1586, %v1429
        %v1588 = vpop.permute.xlu0 %1587
        %1591 = vset.pattern.permute.xlu0 0
        %1592 = vperm.xlu0 %1591, %v1430
        %v1593 = vpop.permute.xlu0 %1592
        %1596 = vset.pattern.permute.xlu0 0
        %1597 = vperm.xlu0 %1596, %v1431
        %v1598 = vpop.permute.xlu0 %1597
        %1601 = vset.pattern.permute.xlu0 0
        %1602 = vperm.xlu0 %1601, %v1432
        %v1603 = vpop.permute.xlu0 %1602
        %1606 = vset.pattern.permute.xlu0 0
        %1607 = vperm.xlu0 %1606, %v1433
        %v1608 = vpop.permute.xlu0 %1607
        %1611 = vset.pattern.permute.xlu0 0
        %1612 = vperm.xlu0 %1611, %v1434
        %v1613 = vpop.permute.xlu0 %1612
        %1616 = vset.pattern.permute.xlu0 0
        %1617 = vperm.xlu0 %1616, %v1435
        %v1618 = vpop.permute.xlu0 %1617
        %1621 = vset.pattern.permute.xlu0 0
        %1622 = vperm.xlu0 %1621, %v1436
        %v1623 = vpop.permute.xlu0 %1622
        %1626 = vset.pattern.permute.xlu0 0
        %1627 = vperm.xlu0 %1626, %v1437
        %v1628 = vpop.permute.xlu0 %1627
        %1631 = vset.pattern.permute.xlu0 0
        %1632 = vperm.xlu0 %1631, %v1438
        %v1633 = vpop.permute.xlu0 %1632
        %1636 = vset.pattern.permute.xlu0 0
        %1637 = vperm.xlu0 %1636, %v1439
        %v1638 = vpop.permute.xlu0 %1637
        %v1640 = vlaneseq
        %v1641 = vshrl.u32 %v1640, 7
        %v1642 = vsub.s32 1, %v1641
        %v1643 = vrot.slane %v739, %v1642
        %v1644 = vlaneseq
        %v1645 = vshrl.u32 %v1644, 7
        %v1646 = vsub.s32 5, %v1645
        %v1647 = vrot.slane %v739, %v1646
        %v1650 = vlaneseq
        %v1651 = vshrl.u32 %v1650, 7
        %v1652 = vsub.s32 1, %v1651
        %v1653 = vrot.slane %v1643, %v1652
        %v1654 = vlaneseq
        %v1655 = vshrl.u32 %v1654, 7
        %v1656 = vsub.s32 1, %v1655
        %v1657 = vrot.slane %v1647, %v1656
        %v1658 = vmul.f32 %v1443, %v1653
        %v1659 = vmul.f32 %v1443, %v1657
        %v1660 = vmul.f32 %v1448, %v1653
        %v1661 = vmul.f32 %v1448, %v1657
        %v1662 = vmul.f32 %v1453, %v1653
        %v1663 = vmul.f32 %v1453, %v1657
        %v1664 = vmul.f32 %v1458, %v1653
        %v1665 = vmul.f32 %v1458, %v1657
        %v1666 = vmul.f32 %v1463, %v1653
        %v1667 = vmul.f32 %v1463, %v1657
        %v1668 = vmul.f32 %v1468, %v1653
        %v1669 = vmul.f32 %v1468, %v1657
        %v1670 = vmul.f32 %v1473, %v1653
        %v1671 = vmul.f32 %v1473, %v1657
        %v1672 = vmul.f32 %v1478, %v1653
        %v1673 = vmul.f32 %v1478, %v1657
        %v1674 = vmul.f32 %v1483, %v1653
        %v1675 = vmul.f32 %v1483, %v1657
        %v1676 = vmul.f32 %v1488, %v1653
        %v1677 = vmul.f32 %v1488, %v1657
        %v1678 = vmul.f32 %v1493, %v1653
        %v1679 = vmul.f32 %v1493, %v1657
        %v1680 = vmul.f32 %v1498, %v1653
        %v1681 = vmul.f32 %v1498, %v1657
        %v1682 = vmul.f32 %v1503, %v1653
        %v1683 = vmul.f32 %v1503, %v1657
        %v1684 = vmul.f32 %v1508, %v1653
        %v1685 = vmul.f32 %v1508, %v1657
        %v1686 = vmul.f32 %v1513, %v1653
        %v1687 = vmul.f32 %v1513, %v1657
        %v1688 = vmul.f32 %v1518, %v1653
        %v1689 = vmul.f32 %v1518, %v1657
        %v1690 = vmul.f32 %v1523, %v1653
        %v1691 = vmul.f32 %v1523, %v1657
        %v1692 = vmul.f32 %v1528, %v1653
        %v1693 = vmul.f32 %v1528, %v1657
        %v1694 = vmul.f32 %v1533, %v1653
        %v1695 = vmul.f32 %v1533, %v1657
        %v1696 = vmul.f32 %v1538, %v1653
        %v1697 = vmul.f32 %v1538, %v1657
        %v1698 = vmul.f32 %v1543, %v1653
        %v1699 = vmul.f32 %v1543, %v1657
        %v1700 = vmul.f32 %v1548, %v1653
        %v1701 = vmul.f32 %v1548, %v1657
        %v1702 = vmul.f32 %v1553, %v1653
        %v1703 = vmul.f32 %v1553, %v1657
        %v1704 = vmul.f32 %v1558, %v1653
        %v1705 = vmul.f32 %v1558, %v1657
        %v1706 = vmul.f32 %v1563, %v1653
        %v1707 = vmul.f32 %v1563, %v1657
        %v1708 = vmul.f32 %v1568, %v1653
        %v1709 = vmul.f32 %v1568, %v1657
        %v1710 = vmul.f32 %v1573, %v1653
        %v1711 = vmul.f32 %v1573, %v1657
        %v1712 = vmul.f32 %v1578, %v1653
        %v1713 = vmul.f32 %v1578, %v1657
        %v1714 = vmul.f32 %v1583, %v1653
        %v1715 = vmul.f32 %v1583, %v1657
        %v1716 = vmul.f32 %v1588, %v1653
        %v1717 = vmul.f32 %v1588, %v1657
        %v1718 = vmul.f32 %v1593, %v1653
        %v1719 = vmul.f32 %v1593, %v1657
        %v1720 = vmul.f32 %v1598, %v1653
        %v1721 = vmul.f32 %v1598, %v1657
        %v1722 = vmul.f32 %v1603, %v1653
        %v1723 = vmul.f32 %v1603, %v1657
        %v1724 = vmul.f32 %v1608, %v1653
        %v1725 = vmul.f32 %v1608, %v1657
        %v1726 = vmul.f32 %v1613, %v1653
        %v1727 = vmul.f32 %v1613, %v1657
        %v1728 = vmul.f32 %v1618, %v1653
        %v1729 = vmul.f32 %v1618, %v1657
        %v1730 = vmul.f32 %v1623, %v1653
        %v1731 = vmul.f32 %v1623, %v1657
        %v1732 = vmul.f32 %v1628, %v1653
        %v1733 = vmul.f32 %v1628, %v1657
        %v1734 = vmul.f32 %v1633, %v1653
        %v1735 = vmul.f32 %v1633, %v1657
        %v1736 = vmul.f32 %v1638, %v1653
        %v1737 = vmul.f32 %v1638, %v1657
        %v1738 = vadd.f32 %v1319, %v1658
        %v1739 = vadd.f32 %v1320, %v1659
        %v1740 = vadd.f32 %v1321, %v1660
        %v1741 = vadd.f32 %v1322, %v1661
        %v1742 = vadd.f32 %v1323, %v1662
        %v1743 = vadd.f32 %v1324, %v1663
        %v1744 = vadd.f32 %v1325, %v1664
        %v1745 = vadd.f32 %v1326, %v1665
        %v1746 = vadd.f32 %v1327, %v1666
        %v1747 = vadd.f32 %v1328, %v1667
        %v1748 = vadd.f32 %v1329, %v1668
        %v1749 = vadd.f32 %v1330, %v1669
        %v1750 = vadd.f32 %v1331, %v1670
        %v1751 = vadd.f32 %v1332, %v1671
        %v1752 = vadd.f32 %v1333, %v1672
        %v1753 = vadd.f32 %v1334, %v1673
        %v1754 = vadd.f32 %v1335, %v1674
        %v1755 = vadd.f32 %v1336, %v1675
        %v1756 = vadd.f32 %v1337, %v1676
        %v1757 = vadd.f32 %v1338, %v1677
        %v1758 = vadd.f32 %v1339, %v1678
        %v1759 = vadd.f32 %v1340, %v1679
        %v1760 = vadd.f32 %v1341, %v1680
        %v1761 = vadd.f32 %v1342, %v1681
        %v1762 = vadd.f32 %v1343, %v1682
        %v1763 = vadd.f32 %v1344, %v1683
        %v1764 = vadd.f32 %v1345, %v1684
        %v1765 = vadd.f32 %v1346, %v1685
        %v1766 = vadd.f32 %v1347, %v1686
        %v1767 = vadd.f32 %v1348, %v1687
        %v1768 = vadd.f32 %v1349, %v1688
        %v1769 = vadd.f32 %v1350, %v1689
        %v1770 = vadd.f32 %v1351, %v1690
        %v1771 = vadd.f32 %v1352, %v1691
        %v1772 = vadd.f32 %v1353, %v1692
        %v1773 = vadd.f32 %v1354, %v1693
        %v1774 = vadd.f32 %v1355, %v1694
        %v1775 = vadd.f32 %v1356, %v1695
        %v1776 = vadd.f32 %v1357, %v1696
        %v1777 = vadd.f32 %v1358, %v1697
        %v1778 = vadd.f32 %v1359, %v1698
        %v1779 = vadd.f32 %v1360, %v1699
        %v1780 = vadd.f32 %v1361, %v1700
        %v1781 = vadd.f32 %v1362, %v1701
        %v1782 = vadd.f32 %v1363, %v1702
        %v1783 = vadd.f32 %v1364, %v1703
        %v1784 = vadd.f32 %v1365, %v1704
        %v1785 = vadd.f32 %v1366, %v1705
        %v1786 = vadd.f32 %v1367, %v1706
        %v1787 = vadd.f32 %v1368, %v1707
        %v1788 = vadd.f32 %v1369, %v1708
        %v1789 = vadd.f32 %v1370, %v1709
        %v1790 = vadd.f32 %v1371, %v1710
        %v1791 = vadd.f32 %v1372, %v1711
        %v1792 = vadd.f32 %v1373, %v1712
        %v1793 = vadd.f32 %v1374, %v1713
        %v1794 = vadd.f32 %v1375, %v1714
        %v1795 = vadd.f32 %v1376, %v1715
        %v1796 = vadd.f32 %v1377, %v1716
        %v1797 = vadd.f32 %v1378, %v1717
        %v1798 = vadd.f32 %v1379, %v1718
        %v1799 = vadd.f32 %v1380, %v1719
        %v1800 = vadd.f32 %v1381, %v1720
        %v1801 = vadd.f32 %v1382, %v1721
        %v1802 = vadd.f32 %v1383, %v1722
        %v1803 = vadd.f32 %v1384, %v1723
        %v1804 = vadd.f32 %v1385, %v1724
        %v1805 = vadd.f32 %v1386, %v1725
        %v1806 = vadd.f32 %v1387, %v1726
        %v1807 = vadd.f32 %v1388, %v1727
        %v1808 = vadd.f32 %v1389, %v1728
        %v1809 = vadd.f32 %v1390, %v1729
        %v1810 = vadd.f32 %v1391, %v1730
        %v1811 = vadd.f32 %v1392, %v1731
        %v1812 = vadd.f32 %v1393, %v1732
        %v1813 = vadd.f32 %v1394, %v1733
        %v1814 = vadd.f32 %v1395, %v1734
        %v1815 = vadd.f32 %v1396, %v1735
        %v1816 = vadd.f32 %v1397, %v1736
        %v1817 = vadd.f32 %v1398, %v1737
        %s1818 = scalar_lea.vmem %s695, 640 [#allocation2]
        %v1819 = vld [vmem:[%s1818] sm:$0xff]
        %v1820 = vld [vmem:[%s1818 + $0x8] sm:$0xff]
        %v1821 = vld [vmem:[%s1818 + $0x10] sm:$0xff]
        %v1822 = vld [vmem:[%s1818 + $0x18] sm:$0xff]
        %v1823 = vld [vmem:[%s1818 + $0x20] sm:$0xff]
        %v1824 = vld [vmem:[%s1818 + $0x28] sm:$0xff]
        %v1825 = vld [vmem:[%s1818 + $0x30] sm:$0xff]
        %v1826 = vld [vmem:[%s1818 + $0x38] sm:$0xff]
        %v1827 = vld [vmem:[%s1818 + $0x40] sm:$0xff]
        %v1828 = vld [vmem:[%s1818 + $0x48] sm:$0xff]
        %v1829 = vld [vmem:[%s1818 + $0x50] sm:$0xff]
        %v1830 = vld [vmem:[%s1818 + $0x58] sm:$0xff]
        %v1831 = vld [vmem:[%s1818 + $0x60] sm:$0xff]
        %v1832 = vld [vmem:[%s1818 + $0x68] sm:$0xff]
        %v1833 = vld [vmem:[%s1818 + $0x70] sm:$0xff]
        %v1834 = vld [vmem:[%s1818 + $0x78] sm:$0xff]
        %v1835 = vld [vmem:[%s1818 + $0x80] sm:$0xff]
        %v1836 = vld [vmem:[%s1818 + $0x88] sm:$0xff]
        %v1837 = vld [vmem:[%s1818 + $0x90] sm:$0xff]
        %v1838 = vld [vmem:[%s1818 + $0x98] sm:$0xff]
        %v1839 = vld [vmem:[%s1818 + $0xa0] sm:$0xff]
        %v1840 = vld [vmem:[%s1818 + $0xa8] sm:$0xff]
        %v1841 = vld [vmem:[%s1818 + $0xb0] sm:$0xff]
        %v1842 = vld [vmem:[%s1818 + $0xb8] sm:$0xff]
        %v1843 = vld [vmem:[%s1818 + $0xc0] sm:$0xff]
        %v1844 = vld [vmem:[%s1818 + $0xc8] sm:$0xff]
        %v1845 = vld [vmem:[%s1818 + $0xd0] sm:$0xff]
        %v1846 = vld [vmem:[%s1818 + $0xd8] sm:$0xff]
        %v1847 = vld [vmem:[%s1818 + $0xe0] sm:$0xff]
        %v1848 = vld [vmem:[%s1818 + $0xe8] sm:$0xff]
        %v1849 = vld [vmem:[%s1818 + $0xf0] sm:$0xff]
        %v1850 = vld [vmem:[%s1818 + $0xf8] sm:$0xff]
        %v1851 = vld [vmem:[%s1818 + $0x100] sm:$0xff]
        %v1852 = vld [vmem:[%s1818 + $0x108] sm:$0xff]
        %v1853 = vld [vmem:[%s1818 + $0x110] sm:$0xff]
        %v1854 = vld [vmem:[%s1818 + $0x118] sm:$0xff]
        %v1855 = vld [vmem:[%s1818 + $0x120] sm:$0xff]
        %v1856 = vld [vmem:[%s1818 + $0x128] sm:$0xff]
        %v1857 = vld [vmem:[%s1818 + $0x130] sm:$0xff]
        %v1858 = vld [vmem:[%s1818 + $0x138] sm:$0xff]
        %1860 = vset.pattern.permute.xlu0 0
        %1861 = vperm.xlu0 %1860, %v1819
        %v1862 = vpop.permute.xlu0 %1861
        %1865 = vset.pattern.permute.xlu0 0
        %1866 = vperm.xlu0 %1865, %v1820
        %v1867 = vpop.permute.xlu0 %1866
        %1870 = vset.pattern.permute.xlu0 0
        %1871 = vperm.xlu0 %1870, %v1821
        %v1872 = vpop.permute.xlu0 %1871
        %1875 = vset.pattern.permute.xlu0 0
        %1876 = vperm.xlu0 %1875, %v1822
        %v1877 = vpop.permute.xlu0 %1876
        %1880 = vset.pattern.permute.xlu0 0
        %1881 = vperm.xlu0 %1880, %v1823
        %v1882 = vpop.permute.xlu0 %1881
        %1885 = vset.pattern.permute.xlu0 0
        %1886 = vperm.xlu0 %1885, %v1824
        %v1887 = vpop.permute.xlu0 %1886
        %1890 = vset.pattern.permute.xlu0 0
        %1891 = vperm.xlu0 %1890, %v1825
        %v1892 = vpop.permute.xlu0 %1891
        %1895 = vset.pattern.permute.xlu0 0
        %1896 = vperm.xlu0 %1895, %v1826
        %v1897 = vpop.permute.xlu0 %1896
        %1900 = vset.pattern.permute.xlu0 0
        %1901 = vperm.xlu0 %1900, %v1827
        %v1902 = vpop.permute.xlu0 %1901
        %1905 = vset.pattern.permute.xlu0 0
        %1906 = vperm.xlu0 %1905, %v1828
        %v1907 = vpop.permute.xlu0 %1906
        %1910 = vset.pattern.permute.xlu0 0
        %1911 = vperm.xlu0 %1910, %v1829
        %v1912 = vpop.permute.xlu0 %1911
        %1915 = vset.pattern.permute.xlu0 0
        %1916 = vperm.xlu0 %1915, %v1830
        %v1917 = vpop.permute.xlu0 %1916
        %1920 = vset.pattern.permute.xlu0 0
        %1921 = vperm.xlu0 %1920, %v1831
        %v1922 = vpop.permute.xlu0 %1921
        %1925 = vset.pattern.permute.xlu0 0
        %1926 = vperm.xlu0 %1925, %v1832
        %v1927 = vpop.permute.xlu0 %1926
        %1930 = vset.pattern.permute.xlu0 0
        %1931 = vperm.xlu0 %1930, %v1833
        %v1932 = vpop.permute.xlu0 %1931
        %1935 = vset.pattern.permute.xlu0 0
        %1936 = vperm.xlu0 %1935, %v1834
        %v1937 = vpop.permute.xlu0 %1936
        %1940 = vset.pattern.permute.xlu0 0
        %1941 = vperm.xlu0 %1940, %v1835
        %v1942 = vpop.permute.xlu0 %1941
        %1945 = vset.pattern.permute.xlu0 0
        %1946 = vperm.xlu0 %1945, %v1836
        %v1947 = vpop.permute.xlu0 %1946
        %1950 = vset.pattern.permute.xlu0 0
        %1951 = vperm.xlu0 %1950, %v1837
        %v1952 = vpop.permute.xlu0 %1951
        %1955 = vset.pattern.permute.xlu0 0
        %1956 = vperm.xlu0 %1955, %v1838
        %v1957 = vpop.permute.xlu0 %1956
        %1960 = vset.pattern.permute.xlu0 0
        %1961 = vperm.xlu0 %1960, %v1839
        %v1962 = vpop.permute.xlu0 %1961
        %1965 = vset.pattern.permute.xlu0 0
        %1966 = vperm.xlu0 %1965, %v1840
        %v1967 = vpop.permute.xlu0 %1966
        %1970 = vset.pattern.permute.xlu0 0
        %1971 = vperm.xlu0 %1970, %v1841
        %v1972 = vpop.permute.xlu0 %1971
        %1975 = vset.pattern.permute.xlu0 0
        %1976 = vperm.xlu0 %1975, %v1842
        %v1977 = vpop.permute.xlu0 %1976
        %1980 = vset.pattern.permute.xlu0 0
        %1981 = vperm.xlu0 %1980, %v1843
        %v1982 = vpop.permute.xlu0 %1981
        %1985 = vset.pattern.permute.xlu0 0
        %1986 = vperm.xlu0 %1985, %v1844
        %v1987 = vpop.permute.xlu0 %1986
        %1990 = vset.pattern.permute.xlu0 0
        %1991 = vperm.xlu0 %1990, %v1845
        %v1992 = vpop.permute.xlu0 %1991
        %1995 = vset.pattern.permute.xlu0 0
        %1996 = vperm.xlu0 %1995, %v1846
        %v1997 = vpop.permute.xlu0 %1996
        %2000 = vset.pattern.permute.xlu0 0
        %2001 = vperm.xlu0 %2000, %v1847
        %v2002 = vpop.permute.xlu0 %2001
        %2005 = vset.pattern.permute.xlu0 0
        %2006 = vperm.xlu0 %2005, %v1848
        %v2007 = vpop.permute.xlu0 %2006
        %2010 = vset.pattern.permute.xlu0 0
        %2011 = vperm.xlu0 %2010, %v1849
        %v2012 = vpop.permute.xlu0 %2011
        %2015 = vset.pattern.permute.xlu0 0
        %2016 = vperm.xlu0 %2015, %v1850
        %v2017 = vpop.permute.xlu0 %2016
        %2020 = vset.pattern.permute.xlu0 0
        %2021 = vperm.xlu0 %2020, %v1851
        %v2022 = vpop.permute.xlu0 %2021
        %2025 = vset.pattern.permute.xlu0 0
        %2026 = vperm.xlu0 %2025, %v1852
        %v2027 = vpop.permute.xlu0 %2026
        %2030 = vset.pattern.permute.xlu0 0
        %2031 = vperm.xlu0 %2030, %v1853
        %v2032 = vpop.permute.xlu0 %2031
        %2035 = vset.pattern.permute.xlu0 0
        %2036 = vperm.xlu0 %2035, %v1854
        %v2037 = vpop.permute.xlu0 %2036
        %2040 = vset.pattern.permute.xlu0 0
        %2041 = vperm.xlu0 %2040, %v1855
        %v2042 = vpop.permute.xlu0 %2041
        %2045 = vset.pattern.permute.xlu0 0
        %2046 = vperm.xlu0 %2045, %v1856
        %v2047 = vpop.permute.xlu0 %2046
        %2050 = vset.pattern.permute.xlu0 0
        %2051 = vperm.xlu0 %2050, %v1857
        %v2052 = vpop.permute.xlu0 %2051
        %2055 = vset.pattern.permute.xlu0 0
        %2056 = vperm.xlu0 %2055, %v1858
        %v2057 = vpop.permute.xlu0 %2056
        %v2059 = vlaneseq
        %v2060 = vshrl.u32 %v2059, 7
        %v2061 = vsub.s32 2, %v2060
        %v2062 = vrot.slane %v739, %v2061
        %v2063 = vlaneseq
        %v2064 = vshrl.u32 %v2063, 7
        %v2065 = vsub.s32 6, %v2064
        %v2066 = vrot.slane %v739, %v2065
        %v2069 = vlaneseq
        %v2070 = vshrl.u32 %v2069, 7
        %v2071 = vsub.s32 2, %v2070
        %v2072 = vrot.slane %v2062, %v2071
        %v2073 = vlaneseq
        %v2074 = vshrl.u32 %v2073, 7
        %v2075 = vsub.s32 2, %v2074
        %v2076 = vrot.slane %v2066, %v2075
        %v2077 = vmul.f32 %v1862, %v2072
        %v2078 = vmul.f32 %v1862, %v2076
        %v2079 = vmul.f32 %v1867, %v2072
        %v2080 = vmul.f32 %v1867, %v2076
        %v2081 = vmul.f32 %v1872, %v2072
        %v2082 = vmul.f32 %v1872, %v2076
        %v2083 = vmul.f32 %v1877, %v2072
        %v2084 = vmul.f32 %v1877, %v2076
        %v2085 = vmul.f32 %v1882, %v2072
        %v2086 = vmul.f32 %v1882, %v2076
        %v2087 = vmul.f32 %v1887, %v2072
        %v2088 = vmul.f32 %v1887, %v2076
        %v2089 = vmul.f32 %v1892, %v2072
        %v2090 = vmul.f32 %v1892, %v2076
        %v2091 = vmul.f32 %v1897, %v2072
        %v2092 = vmul.f32 %v1897, %v2076
        %v2093 = vmul.f32 %v1902, %v2072
        %v2094 = vmul.f32 %v1902, %v2076
        %v2095 = vmul.f32 %v1907, %v2072
        %v2096 = vmul.f32 %v1907, %v2076
        %v2097 = vmul.f32 %v1912, %v2072
        %v2098 = vmul.f32 %v1912, %v2076
        %v2099 = vmul.f32 %v1917, %v2072
        %v2100 = vmul.f32 %v1917, %v2076
        %v2101 = vmul.f32 %v1922, %v2072
        %v2102 = vmul.f32 %v1922, %v2076
        %v2103 = vmul.f32 %v1927, %v2072
        %v2104 = vmul.f32 %v1927, %v2076
        %v2105 = vmul.f32 %v1932, %v2072
        %v2106 = vmul.f32 %v1932, %v2076
        %v2107 = vmul.f32 %v1937, %v2072
        %v2108 = vmul.f32 %v1937, %v2076
        %v2109 = vmul.f32 %v1942, %v2072
        %v2110 = vmul.f32 %v1942, %v2076
        %v2111 = vmul.f32 %v1947, %v2072
        %v2112 = vmul.f32 %v1947, %v2076
        %v2113 = vmul.f32 %v1952, %v2072
        %v2114 = vmul.f32 %v1952, %v2076
        %v2115 = vmul.f32 %v1957, %v2072
        %v2116 = vmul.f32 %v1957, %v2076
        %v2117 = vmul.f32 %v1962, %v2072
        %v2118 = vmul.f32 %v1962, %v2076
        %v2119 = vmul.f32 %v1967, %v2072
        %v2120 = vmul.f32 %v1967, %v2076
        %v2121 = vmul.f32 %v1972, %v2072
        %v2122 = vmul.f32 %v1972, %v2076
        %v2123 = vmul.f32 %v1977, %v2072
        %v2124 = vmul.f32 %v1977, %v2076
        %v2125 = vmul.f32 %v1982, %v2072
        %v2126 = vmul.f32 %v1982, %v2076
        %v2127 = vmul.f32 %v1987, %v2072
        %v2128 = vmul.f32 %v1987, %v2076
        %v2129 = vmul.f32 %v1992, %v2072
        %v2130 = vmul.f32 %v1992, %v2076
        %v2131 = vmul.f32 %v1997, %v2072
        %v2132 = vmul.f32 %v1997, %v2076
        %v2133 = vmul.f32 %v2002, %v2072
        %v2134 = vmul.f32 %v2002, %v2076
        %v2135 = vmul.f32 %v2007, %v2072
        %v2136 = vmul.f32 %v2007, %v2076
        %v2137 = vmul.f32 %v2012, %v2072
        %v2138 = vmul.f32 %v2012, %v2076
        %v2139 = vmul.f32 %v2017, %v2072
        %v2140 = vmul.f32 %v2017, %v2076
        %v2141 = vmul.f32 %v2022, %v2072
        %v2142 = vmul.f32 %v2022, %v2076
        %v2143 = vmul.f32 %v2027, %v2072
        %v2144 = vmul.f32 %v2027, %v2076
        %v2145 = vmul.f32 %v2032, %v2072
        %v2146 = vmul.f32 %v2032, %v2076
        %v2147 = vmul.f32 %v2037, %v2072
        %v2148 = vmul.f32 %v2037, %v2076
        %v2149 = vmul.f32 %v2042, %v2072
        %v2150 = vmul.f32 %v2042, %v2076
        %v2151 = vmul.f32 %v2047, %v2072
        %v2152 = vmul.f32 %v2047, %v2076
        %v2153 = vmul.f32 %v2052, %v2072
        %v2154 = vmul.f32 %v2052, %v2076
        %v2155 = vmul.f32 %v2057, %v2072
        %v2156 = vmul.f32 %v2057, %v2076
        %v2157 = vadd.f32 %v1738, %v2077
        %v2158 = vadd.f32 %v1739, %v2078
        %v2159 = vadd.f32 %v1740, %v2079
        %v2160 = vadd.f32 %v1741, %v2080
        %v2161 = vadd.f32 %v1742, %v2081
        %v2162 = vadd.f32 %v1743, %v2082
        %v2163 = vadd.f32 %v1744, %v2083
        %v2164 = vadd.f32 %v1745, %v2084
        %v2165 = vadd.f32 %v1746, %v2085
        %v2166 = vadd.f32 %v1747, %v2086
        %v2167 = vadd.f32 %v1748, %v2087
        %v2168 = vadd.f32 %v1749, %v2088
        %v2169 = vadd.f32 %v1750, %v2089
        %v2170 = vadd.f32 %v1751, %v2090
        %v2171 = vadd.f32 %v1752, %v2091
        %v2172 = vadd.f32 %v1753, %v2092
        %v2173 = vadd.f32 %v1754, %v2093
        %v2174 = vadd.f32 %v1755, %v2094
        %v2175 = vadd.f32 %v1756, %v2095
        %v2176 = vadd.f32 %v1757, %v2096
        %v2177 = vadd.f32 %v1758, %v2097
        %v2178 = vadd.f32 %v1759, %v2098
        %v2179 = vadd.f32 %v1760, %v2099
        %v2180 = vadd.f32 %v1761, %v2100
        %v2181 = vadd.f32 %v1762, %v2101
        %v2182 = vadd.f32 %v1763, %v2102
        %v2183 = vadd.f32 %v1764, %v2103
        %v2184 = vadd.f32 %v1765, %v2104
        %v2185 = vadd.f32 %v1766, %v2105
        %v2186 = vadd.f32 %v1767, %v2106
        %v2187 = vadd.f32 %v1768, %v2107
        %v2188 = vadd.f32 %v1769, %v2108
        %v2189 = vadd.f32 %v1770, %v2109
        %v2190 = vadd.f32 %v1771, %v2110
        %v2191 = vadd.f32 %v1772, %v2111
        %v2192 = vadd.f32 %v1773, %v2112
        %v2193 = vadd.f32 %v1774, %v2113
        %v2194 = vadd.f32 %v1775, %v2114
        %v2195 = vadd.f32 %v1776, %v2115
        %v2196 = vadd.f32 %v1777, %v2116
        %v2197 = vadd.f32 %v1778, %v2117
        %v2198 = vadd.f32 %v1779, %v2118
        %v2199 = vadd.f32 %v1780, %v2119
        %v2200 = vadd.f32 %v1781, %v2120
        %v2201 = vadd.f32 %v1782, %v2121
        %v2202 = vadd.f32 %v1783, %v2122
        %v2203 = vadd.f32 %v1784, %v2123
        %v2204 = vadd.f32 %v1785, %v2124
        %v2205 = vadd.f32 %v1786, %v2125
        %v2206 = vadd.f32 %v1787, %v2126
        %v2207 = vadd.f32 %v1788, %v2127
        %v2208 = vadd.f32 %v1789, %v2128
        %v2209 = vadd.f32 %v1790, %v2129
        %v2210 = vadd.f32 %v1791, %v2130
        %v2211 = vadd.f32 %v1792, %v2131
        %v2212 = vadd.f32 %v1793, %v2132
        %v2213 = vadd.f32 %v1794, %v2133
        %v2214 = vadd.f32 %v1795, %v2134
        %v2215 = vadd.f32 %v1796, %v2135
        %v2216 = vadd.f32 %v1797, %v2136
        %v2217 = vadd.f32 %v1798, %v2137
        %v2218 = vadd.f32 %v1799, %v2138
        %v2219 = vadd.f32 %v1800, %v2139
        %v2220 = vadd.f32 %v1801, %v2140
        %v2221 = vadd.f32 %v1802, %v2141
        %v2222 = vadd.f32 %v1803, %v2142
        %v2223 = vadd.f32 %v1804, %v2143
        %v2224 = vadd.f32 %v1805, %v2144
        %v2225 = vadd.f32 %v1806, %v2145
        %v2226 = vadd.f32 %v1807, %v2146
        %v2227 = vadd.f32 %v1808, %v2147
        %v2228 = vadd.f32 %v1809, %v2148
        %v2229 = vadd.f32 %v1810, %v2149
        %v2230 = vadd.f32 %v1811, %v2150
        %v2231 = vadd.f32 %v1812, %v2151
        %v2232 = vadd.f32 %v1813, %v2152
        %v2233 = vadd.f32 %v1814, %v2153
        %v2234 = vadd.f32 %v1815, %v2154
        %v2235 = vadd.f32 %v1816, %v2155
        %v2236 = vadd.f32 %v1817, %v2156
        %v2237 = vadd.f32 %v2157, 3.0
        %v2238 = vadd.f32 %v2158, 3.0
        %v2239 = vadd.f32 %v2159, 3.0
        %v2240 = vadd.f32 %v2160, 3.0
        %v2241 = vadd.f32 %v2161, 3.0
        %v2242 = vadd.f32 %v2162, 3.0
        %v2243 = vadd.f32 %v2163, 3.0
        %v2244 = vadd.f32 %v2164, 3.0
        %v2245 = vadd.f32 %v2165, 3.0
        %v2246 = vadd.f32 %v2166, 3.0
        %v2247 = vadd.f32 %v2167, 3.0
        %v2248 = vadd.f32 %v2168, 3.0
        %v2249 = vadd.f32 %v2169, 3.0
        %v2250 = vadd.f32 %v2170, 3.0
        %v2251 = vadd.f32 %v2171, 3.0
        %v2252 = vadd.f32 %v2172, 3.0
        %v2253 = vadd.f32 %v2173, 3.0
        %v2254 = vadd.f32 %v2174, 3.0
        %v2255 = vadd.f32 %v2175, 3.0
        %v2256 = vadd.f32 %v2176, 3.0
        %v2257 = vadd.f32 %v2177, 3.0
        %v2258 = vadd.f32 %v2178, 3.0
        %v2259 = vadd.f32 %v2179, 3.0
        %v2260 = vadd.f32 %v2180, 3.0
        %v2261 = vadd.f32 %v2181, 3.0
        %v2262 = vadd.f32 %v2182, 3.0
        %v2263 = vadd.f32 %v2183, 3.0
        %v2264 = vadd.f32 %v2184, 3.0
        %v2265 = vadd.f32 %v2185, 3.0
        %v2266 = vadd.f32 %v2186, 3.0
        %v2267 = vadd.f32 %v2187, 3.0
        %v2268 = vadd.f32 %v2188, 3.0
        %v2269 = vadd.f32 %v2189, 3.0
        %v2270 = vadd.f32 %v2190, 3.0
        %v2271 = vadd.f32 %v2191, 3.0
        %v2272 = vadd.f32 %v2192, 3.0
        %v2273 = vadd.f32 %v2193, 3.0
        %v2274 = vadd.f32 %v2194, 3.0
        %v2275 = vadd.f32 %v2195, 3.0
        %v2276 = vadd.f32 %v2196, 3.0
        %v2277 = vadd.f32 %v2197, 3.0
        %v2278 = vadd.f32 %v2198, 3.0
        %v2279 = vadd.f32 %v2199, 3.0
        %v2280 = vadd.f32 %v2200, 3.0
        %v2281 = vadd.f32 %v2201, 3.0
        %v2282 = vadd.f32 %v2202, 3.0
        %v2283 = vadd.f32 %v2203, 3.0
        %v2284 = vadd.f32 %v2204, 3.0
        %v2285 = vadd.f32 %v2205, 3.0
        %v2286 = vadd.f32 %v2206, 3.0
        %v2287 = vadd.f32 %v2207, 3.0
        %v2288 = vadd.f32 %v2208, 3.0
        %v2289 = vadd.f32 %v2209, 3.0
        %v2290 = vadd.f32 %v2210, 3.0
        %v2291 = vadd.f32 %v2211, 3.0
        %v2292 = vadd.f32 %v2212, 3.0
        %v2293 = vadd.f32 %v2213, 3.0
        %v2294 = vadd.f32 %v2214, 3.0
        %v2295 = vadd.f32 %v2215, 3.0
        %v2296 = vadd.f32 %v2216, 3.0
        %v2297 = vadd.f32 %v2217, 3.0
        %v2298 = vadd.f32 %v2218, 3.0
        %v2299 = vadd.f32 %v2219, 3.0
        %v2300 = vadd.f32 %v2220, 3.0
        %v2301 = vadd.f32 %v2221, 3.0
        %v2302 = vadd.f32 %v2222, 3.0
        %v2303 = vadd.f32 %v2223, 3.0
        %v2304 = vadd.f32 %v2224, 3.0
        %v2305 = vadd.f32 %v2225, 3.0
        %v2306 = vadd.f32 %v2226, 3.0
        %v2307 = vadd.f32 %v2227, 3.0
        %v2308 = vadd.f32 %v2228, 3.0
        %v2309 = vadd.f32 %v2229, 3.0
        %v2310 = vadd.f32 %v2230, 3.0
        %v2311 = vadd.f32 %v2231, 3.0
        %v2312 = vadd.f32 %v2232, 3.0
        %v2313 = vadd.f32 %v2233, 3.0
        %v2314 = vadd.f32 %v2234, 3.0
        %v2315 = vadd.f32 %v2235, 3.0
        %v2316 = vadd.f32 %v2236, 3.0
        %v2317 = vmax.f32 %v2237, 0.0
        %v2318 = vmax.f32 %v2238, 0.0
        %v2319 = vmax.f32 %v2239, 0.0
        %v2320 = vmax.f32 %v2240, 0.0
        %v2321 = vmax.f32 %v2241, 0.0
        %v2322 = vmax.f32 %v2242, 0.0
        %v2323 = vmax.f32 %v2243, 0.0
        %v2324 = vmax.f32 %v2244, 0.0
        %v2325 = vmax.f32 %v2245, 0.0
        %v2326 = vmax.f32 %v2246, 0.0
        %v2327 = vmax.f32 %v2247, 0.0
        %v2328 = vmax.f32 %v2248, 0.0
        %v2329 = vmax.f32 %v2249, 0.0
        %v2330 = vmax.f32 %v2250, 0.0
        %v2331 = vmax.f32 %v2251, 0.0
        %v2332 = vmax.f32 %v2252, 0.0
        %v2333 = vmax.f32 %v2253, 0.0
        %v2334 = vmax.f32 %v2254, 0.0
        %v2335 = vmax.f32 %v2255, 0.0
        %v2336 = vmax.f32 %v2256, 0.0
        %v2337 = vmax.f32 %v2257, 0.0
        %v2338 = vmax.f32 %v2258, 0.0
        %v2339 = vmax.f32 %v2259, 0.0
        %v2340 = vmax.f32 %v2260, 0.0
        %v2341 = vmax.f32 %v2261, 0.0
        %v2342 = vmax.f32 %v2262, 0.0
        %v2343 = vmax.f32 %v2263, 0.0
        %v2344 = vmax.f32 %v2264, 0.0
        %v2345 = vmax.f32 %v2265, 0.0
        %v2346 = vmax.f32 %v2266, 0.0
        %v2347 = vmax.f32 %v2267, 0.0
        %v2348 = vmax.f32 %v2268, 0.0
        %v2349 = vmax.f32 %v2269, 0.0
        %v2350 = vmax.f32 %v2270, 0.0
        %v2351 = vmax.f32 %v2271, 0.0
        %v2352 = vmax.f32 %v2272, 0.0
        %v2353 = vmax.f32 %v2273, 0.0
        %v2354 = vmax.f32 %v2274, 0.0
        %v2355 = vmax.f32 %v2275, 0.0
        %v2356 = vmax.f32 %v2276, 0.0
        %v2357 = vmax.f32 %v2277, 0.0
        %v2358 = vmax.f32 %v2278, 0.0
        %v2359 = vmax.f32 %v2279, 0.0
        %v2360 = vmax.f32 %v2280, 0.0
        %v2361 = vmax.f32 %v2281, 0.0
        %v2362 = vmax.f32 %v2282, 0.0
        %v2363 = vmax.f32 %v2283, 0.0
        %v2364 = vmax.f32 %v2284, 0.0
        %v2365 = vmax.f32 %v2285, 0.0
        %v2366 = vmax.f32 %v2286, 0.0
        %v2367 = vmax.f32 %v2287, 0.0
        %v2368 = vmax.f32 %v2288, 0.0
        %v2369 = vmax.f32 %v2289, 0.0
        %v2370 = vmax.f32 %v2290, 0.0
        %v2371 = vmax.f32 %v2291, 0.0
        %v2372 = vmax.f32 %v2292, 0.0
        %v2373 = vmax.f32 %v2293, 0.0
        %v2374 = vmax.f32 %v2294, 0.0
        %v2375 = vmax.f32 %v2295, 0.0
        %v2376 = vmax.f32 %v2296, 0.0
        %v2377 = vmax.f32 %v2297, 0.0
        %v2378 = vmax.f32 %v2298, 0.0
        %v2379 = vmax.f32 %v2299, 0.0
        %v2380 = vmax.f32 %v2300, 0.0
        %v2381 = vmax.f32 %v2301, 0.0
        %v2382 = vmax.f32 %v2302, 0.0
        %v2383 = vmax.f32 %v2303, 0.0
        %v2384 = vmax.f32 %v2304, 0.0
        %v2385 = vmax.f32 %v2305, 0.0
        %v2386 = vmax.f32 %v2306, 0.0
        %v2387 = vmax.f32 %v2307, 0.0
        %v2388 = vmax.f32 %v2308, 0.0
        %v2389 = vmax.f32 %v2309, 0.0
        %v2390 = vmax.f32 %v2310, 0.0
        %v2391 = vmax.f32 %v2311, 0.0
        %v2392 = vmax.f32 %v2312, 0.0
        %v2393 = vmax.f32 %v2313, 0.0
        %v2394 = vmax.f32 %v2314, 0.0
        %v2395 = vmax.f32 %v2315, 0.0
        %v2396 = vmax.f32 %v2316, 0.0
        %v2397 = vmin.f32 %v2317, 6.0
        %v2398 = vmin.f32 %v2318, 6.0
        %v2399 = vmin.f32 %v2319, 6.0
        %v2400 = vmin.f32 %v2320, 6.0
        %v2401 = vmin.f32 %v2321, 6.0
        %v2402 = vmin.f32 %v2322, 6.0
        %v2403 = vmin.f32 %v2323, 6.0
        %v2404 = vmin.f32 %v2324, 6.0
        %v2405 = vmin.f32 %v2325, 6.0
        %v2406 = vmin.f32 %v2326, 6.0
        %v2407 = vmin.f32 %v2327, 6.0
        %v2408 = vmin.f32 %v2328, 6.0
        %v2409 = vmin.f32 %v2329, 6.0
        %v2410 = vmin.f32 %v2330, 6.0
        %v2411 = vmin.f32 %v2331, 6.0
        %v2412 = vmin.f32 %v2332, 6.0
        %v2413 = vmin.f32 %v2333, 6.0
        %v2414 = vmin.f32 %v2334, 6.0
        %v2415 = vmin.f32 %v2335, 6.0
        %v2416 = vmin.f32 %v2336, 6.0
        %v2417 = vmin.f32 %v2337, 6.0
        %v2418 = vmin.f32 %v2338, 6.0
        %v2419 = vmin.f32 %v2339, 6.0
        %v2420 = vmin.f32 %v2340, 6.0
        %v2421 = vmin.f32 %v2341, 6.0
        %v2422 = vmin.f32 %v2342, 6.0
        %v2423 = vmin.f32 %v2343, 6.0
        %v2424 = vmin.f32 %v2344, 6.0
        %v2425 = vmin.f32 %v2345, 6.0
        %v2426 = vmin.f32 %v2346, 6.0
        %v2427 = vmin.f32 %v2347, 6.0
        %v2428 = vmin.f32 %v2348, 6.0
        %v2429 = vmin.f32 %v2349, 6.0
        %v2430 = vmin.f32 %v2350, 6.0
        %v2431 = vmin.f32 %v2351, 6.0
        %v2432 = vmin.f32 %v2352, 6.0
        %v2433 = vmin.f32 %v2353, 6.0
        %v2434 = vmin.f32 %v2354, 6.0
        %v2435 = vmin.f32 %v2355, 6.0
        %v2436 = vmin.f32 %v2356, 6.0
        %v2437 = vmin.f32 %v2357, 6.0
        %v2438 = vmin.f32 %v2358, 6.0
        %v2439 = vmin.f32 %v2359, 6.0
        %v2440 = vmin.f32 %v2360, 6.0
        %v2441 = vmin.f32 %v2361, 6.0
        %v2442 = vmin.f32 %v2362, 6.0
        %v2443 = vmin.f32 %v2363, 6.0
        %v2444 = vmin.f32 %v2364, 6.0
        %v2445 = vmin.f32 %v2365, 6.0
        %v2446 = vmin.f32 %v2366, 6.0
        %v2447 = vmin.f32 %v2367, 6.0
        %v2448 = vmin.f32 %v2368, 6.0
        %v2449 = vmin.f32 %v2369, 6.0
        %v2450 = vmin.f32 %v2370, 6.0
        %v2451 = vmin.f32 %v2371, 6.0
        %v2452 = vmin.f32 %v2372, 6.0
        %v2453 = vmin.f32 %v2373, 6.0
        %v2454 = vmin.f32 %v2374, 6.0
        %v2455 = vmin.f32 %v2375, 6.0
        %v2456 = vmin.f32 %v2376, 6.0
        %v2457 = vmin.f32 %v2377, 6.0
        %v2458 = vmin.f32 %v2378, 6.0
        %v2459 = vmin.f32 %v2379, 6.0
        %v2460 = vmin.f32 %v2380, 6.0
        %v2461 = vmin.f32 %v2381, 6.0
        %v2462 = vmin.f32 %v2382, 6.0
        %v2463 = vmin.f32 %v2383, 6.0
        %v2464 = vmin.f32 %v2384, 6.0
        %v2465 = vmin.f32 %v2385, 6.0
        %v2466 = vmin.f32 %v2386, 6.0
        %v2467 = vmin.f32 %v2387, 6.0
        %v2468 = vmin.f32 %v2388, 6.0
        %v2469 = vmin.f32 %v2389, 6.0
        %v2470 = vmin.f32 %v2390, 6.0
        %v2471 = vmin.f32 %v2391, 6.0
        %v2472 = vmin.f32 %v2392, 6.0
        %v2473 = vmin.f32 %v2393, 6.0
        %v2474 = vmin.f32 %v2394, 6.0
        %v2475 = vmin.f32 %v2395, 6.0
        %v2476 = vmin.f32 %v2396, 6.0
        %v2477 = vmul.f32 %v2157, %v2397
        %v2478 = vmul.f32 %v2158, %v2398
        %v2479 = vmul.f32 %v2159, %v2399
        %v2480 = vmul.f32 %v2160, %v2400
        %v2481 = vmul.f32 %v2161, %v2401
        %v2482 = vmul.f32 %v2162, %v2402
        %v2483 = vmul.f32 %v2163, %v2403
        %v2484 = vmul.f32 %v2164, %v2404
        %v2485 = vmul.f32 %v2165, %v2405
        %v2486 = vmul.f32 %v2166, %v2406
        %v2487 = vmul.f32 %v2167, %v2407
        %v2488 = vmul.f32 %v2168, %v2408
        %v2489 = vmul.f32 %v2169, %v2409
        %v2490 = vmul.f32 %v2170, %v2410
        %v2491 = vmul.f32 %v2171, %v2411
        %v2492 = vmul.f32 %v2172, %v2412
        %v2493 = vmul.f32 %v2173, %v2413
        %v2494 = vmul.f32 %v2174, %v2414
        %v2495 = vmul.f32 %v2175, %v2415
        %v2496 = vmul.f32 %v2176, %v2416
        %v2497 = vmul.f32 %v2177, %v2417
        %v2498 = vmul.f32 %v2178, %v2418
        %v2499 = vmul.f32 %v2179, %v2419
        %v2500 = vmul.f32 %v2180, %v2420
        %v2501 = vmul.f32 %v2181, %v2421
        %v2502 = vmul.f32 %v2182, %v2422
        %v2503 = vmul.f32 %v2183, %v2423
        %v2504 = vmul.f32 %v2184, %v2424
        %v2505 = vmul.f32 %v2185, %v2425
        %v2506 = vmul.f32 %v2186, %v2426
        %v2507 = vmul.f32 %v2187, %v2427
        %v2508 = vmul.f32 %v2188, %v2428
        %v2509 = vmul.f32 %v2189, %v2429
        %v2510 = vmul.f32 %v2190, %v2430
        %v2511 = vmul.f32 %v2191, %v2431
        %v2512 = vmul.f32 %v2192, %v2432
        %v2513 = vmul.f32 %v2193, %v2433
        %v2514 = vmul.f32 %v2194, %v2434
        %v2515 = vmul.f32 %v2195, %v2435
        %v2516 = vmul.f32 %v2196, %v2436
        %v2517 = vmul.f32 %v2197, %v2437
        %v2518 = vmul.f32 %v2198, %v2438
        %v2519 = vmul.f32 %v2199, %v2439
        %v2520 = vmul.f32 %v2200, %v2440
        %v2521 = vmul.f32 %v2201, %v2441
        %v2522 = vmul.f32 %v2202, %v2442
        %v2523 = vmul.f32 %v2203, %v2443
        %v2524 = vmul.f32 %v2204, %v2444
        %v2525 = vmul.f32 %v2205, %v2445
        %v2526 = vmul.f32 %v2206, %v2446
        %v2527 = vmul.f32 %v2207, %v2447
        %v2528 = vmul.f32 %v2208, %v2448
        %v2529 = vmul.f32 %v2209, %v2449
        %v2530 = vmul.f32 %v2210, %v2450
        %v2531 = vmul.f32 %v2211, %v2451
        %v2532 = vmul.f32 %v2212, %v2452
        %v2533 = vmul.f32 %v2213, %v2453
        %v2534 = vmul.f32 %v2214, %v2454
        %v2535 = vmul.f32 %v2215, %v2455
        %v2536 = vmul.f32 %v2216, %v2456
        %v2537 = vmul.f32 %v2217, %v2457
        %v2538 = vmul.f32 %v2218, %v2458
        %v2539 = vmul.f32 %v2219, %v2459
        %v2540 = vmul.f32 %v2220, %v2460
        %v2541 = vmul.f32 %v2221, %v2461
        %v2542 = vmul.f32 %v2222, %v2462
        %v2543 = vmul.f32 %v2223, %v2463
        %v2544 = vmul.f32 %v2224, %v2464
        %v2545 = vmul.f32 %v2225, %v2465
        %v2546 = vmul.f32 %v2226, %v2466
        %v2547 = vmul.f32 %v2227, %v2467
        %v2548 = vmul.f32 %v2228, %v2468
        %v2549 = vmul.f32 %v2229, %v2469
        %v2550 = vmul.f32 %v2230, %v2470
        %v2551 = vmul.f32 %v2231, %v2471
        %v2552 = vmul.f32 %v2232, %v2472
        %v2553 = vmul.f32 %v2233, %v2473
        %v2554 = vmul.f32 %v2234, %v2474
        %v2555 = vmul.f32 %v2235, %v2475
        %v2556 = vmul.f32 %v2236, %v2476
        %2557 = vst [vmem:[%s725] sm:$0xff] %v2477
        %2558 = vst [vmem:[%s725 + $0x8] sm:$0xff] %v2478
        %2559 = vst [vmem:[%s725 + $0x10] sm:$0xff] %v2479
        %2560 = vst [vmem:[%s725 + $0x18] sm:$0xff] %v2480
        %2561 = vst [vmem:[%s725 + $0x20] sm:$0xff] %v2481
        %2562 = vst [vmem:[%s725 + $0x28] sm:$0xff] %v2482
        %2563 = vst [vmem:[%s725 + $0x30] sm:$0xff] %v2483
        %2564 = vst [vmem:[%s725 + $0x38] sm:$0xff] %v2484
        %2565 = vst [vmem:[%s725 + $0x40] sm:$0xff] %v2485
        %2566 = vst [vmem:[%s725 + $0x48] sm:$0xff] %v2486
        %2567 = vst [vmem:[%s725 + $0x50] sm:$0xff] %v2487
        %2568 = vst [vmem:[%s725 + $0x58] sm:$0xff] %v2488
        %2569 = vst [vmem:[%s725 + $0x60] sm:$0xff] %v2489
        %2570 = vst [vmem:[%s725 + $0x68] sm:$0xff] %v2490
        %2571 = vst [vmem:[%s725 + $0x70] sm:$0xff] %v2491
        %2572 = vst [vmem:[%s725 + $0x78] sm:$0xff] %v2492
        %2573 = vst [vmem:[%s725 + $0x80] sm:$0xff] %v2493
        %2574 = vst [vmem:[%s725 + $0x88] sm:$0xff] %v2494
        %2575 = vst [vmem:[%s725 + $0x90] sm:$0xff] %v2495
        %2576 = vst [vmem:[%s725 + $0x98] sm:$0xff] %v2496
        %2577 = vst [vmem:[%s725 + $0xa0] sm:$0xff] %v2497
        %2578 = vst [vmem:[%s725 + $0xa8] sm:$0xff] %v2498
        %2579 = vst [vmem:[%s725 + $0xb0] sm:$0xff] %v2499
        %2580 = vst [vmem:[%s725 + $0xb8] sm:$0xff] %v2500
        %2581 = vst [vmem:[%s725 + $0xc0] sm:$0xff] %v2501
        %2582 = vst [vmem:[%s725 + $0xc8] sm:$0xff] %v2502
        %2583 = vst [vmem:[%s725 + $0xd0] sm:$0xff] %v2503
        %2584 = vst [vmem:[%s725 + $0xd8] sm:$0xff] %v2504
        %2585 = vst [vmem:[%s725 + $0xe0] sm:$0xff] %v2505
        %2586 = vst [vmem:[%s725 + $0xe8] sm:$0xff] %v2506
        %2587 = vst [vmem:[%s725 + $0xf0] sm:$0xff] %v2507
        %2588 = vst [vmem:[%s725 + $0xf8] sm:$0xff] %v2508
        %2589 = vst [vmem:[%s725 + $0x100] sm:$0xff] %v2509
        %2590 = vst [vmem:[%s725 + $0x108] sm:$0xff] %v2510
        %2591 = vst [vmem:[%s725 + $0x110] sm:$0xff] %v2511
        %2592 = vst [vmem:[%s725 + $0x118] sm:$0xff] %v2512
        %2593 = vst [vmem:[%s725 + $0x120] sm:$0xff] %v2513
        %2594 = vst [vmem:[%s725 + $0x128] sm:$0xff] %v2514
        %2595 = vst [vmem:[%s725 + $0x130] sm:$0xff] %v2515
        %2596 = vst [vmem:[%s725 + $0x138] sm:$0xff] %v2516
        %2597 = vst [vmem:[%s725 + $0x140] sm:$0xff] %v2517
        %2598 = vst [vmem:[%s725 + $0x148] sm:$0xff] %v2518
        %2599 = vst [vmem:[%s725 + $0x150] sm:$0xff] %v2519
        %2600 = vst [vmem:[%s725 + $0x158] sm:$0xff] %v2520
        %2601 = vst [vmem:[%s725 + $0x160] sm:$0xff] %v2521
        %2602 = vst [vmem:[%s725 + $0x168] sm:$0xff] %v2522
        %2603 = vst [vmem:[%s725 + $0x170] sm:$0xff] %v2523
        %2604 = vst [vmem:[%s725 + $0x178] sm:$0xff] %v2524
        %2605 = vst [vmem:[%s725 + $0x180] sm:$0xff] %v2525
        %2606 = vst [vmem:[%s725 + $0x188] sm:$0xff] %v2526
        %2607 = vst [vmem:[%s725 + $0x190] sm:$0xff] %v2527
        %2608 = vst [vmem:[%s725 + $0x198] sm:$0xff] %v2528
        %2609 = vst [vmem:[%s725 + $0x1a0] sm:$0xff] %v2529
        %2610 = vst [vmem:[%s725 + $0x1a8] sm:$0xff] %v2530
        %2611 = vst [vmem:[%s725 + $0x1b0] sm:$0xff] %v2531
        %2612 = vst [vmem:[%s725 + $0x1b8] sm:$0xff] %v2532
        %2613 = vst [vmem:[%s725 + $0x1c0] sm:$0xff] %v2533
        %2614 = vst [vmem:[%s725 + $0x1c8] sm:$0xff] %v2534
        %2615 = vst [vmem:[%s725 + $0x1d0] sm:$0xff] %v2535
        %2616 = vst [vmem:[%s725 + $0x1d8] sm:$0xff] %v2536
        %2617 = vst [vmem:[%s725 + $0x1e0] sm:$0xff] %v2537
        %2618 = vst [vmem:[%s725 + $0x1e8] sm:$0xff] %v2538
        %2619 = vst [vmem:[%s725 + $0x1f0] sm:$0xff] %v2539
        %2620 = vst [vmem:[%s725 + $0x1f8] sm:$0xff] %v2540
        %2621 = vst [vmem:[%s725 + $0x200] sm:$0xff] %v2541
        %2622 = vst [vmem:[%s725 + $0x208] sm:$0xff] %v2542
        %2623 = vst [vmem:[%s725 + $0x210] sm:$0xff] %v2543
        %2624 = vst [vmem:[%s725 + $0x218] sm:$0xff] %v2544
        %2625 = vst [vmem:[%s725 + $0x220] sm:$0xff] %v2545
        %2626 = vst [vmem:[%s725 + $0x228] sm:$0xff] %v2546
        %2627 = vst [vmem:[%s725 + $0x230] sm:$0xff] %v2547
        %2628 = vst [vmem:[%s725 + $0x238] sm:$0xff] %v2548
        %2629 = vst [vmem:[%s725 + $0x240] sm:$0xff] %v2549
        %2630 = vst [vmem:[%s725 + $0x248] sm:$0xff] %v2550
        %2631 = vst [vmem:[%s725 + $0x250] sm:$0xff] %v2551
        %2632 = vst [vmem:[%s725 + $0x258] sm:$0xff] %v2552
        %2633 = vst [vmem:[%s725 + $0x260] sm:$0xff] %v2553
        %2634 = vst [vmem:[%s725 + $0x268] sm:$0xff] %v2554
        %2635 = vst [vmem:[%s725 + $0x270] sm:$0xff] %v2555
        %2636 = vst [vmem:[%s725 + $0x278] sm:$0xff] %v2556
        %s2637 = sand.u32 %s117, 1
        %s2638 = scalar_lea.sflag [#allocation4], %s2637
        %s2639 = sand.u32 %s117, 1
        %s2640 = smul.addr %s2639, 640
        %s2641 = scalar_lea.vmem [#allocation3], %s2640
        // Predicated region
        $region71: #{tpu_custom_call.1} parent=65 // pred_check
          %p2642 = pneg %p127
        $region72: #{tpu_custom_call.1} parent=65 // pred_check_branch
          %2644 = sbr.rel (%p2642) target = $region74
        $region73: #{tpu_custom_call.1} parent=65 // pred_region
          %s2645 = smul.u32 40, %s22
          %s2647 = ssub.s32 10240, 10240
          %2648 = vsyncadd %s2638, %s2647
          %s2649 = smul.addr %s2645, 2
          %s2650 = smul.addr %s21, 320
          %s2651 = sadd.s32 %s2649, %s2650
          %s2652 = smul.addr %s2651, 128
          %s2653 = scalar_lea.hbm %s3, %s2652
          %s2654 = sshll.u32 %s2641, 4
          %s2655 = int_to_ptr.vmem [resolvable:$true] %s2654
          %2660 = dma.vmem_to_hbm [thread:$0]  %s2655, 10240, %s2653, %s2638, 256, 256, 16
        $region74: #{tpu_custom_call.1} parent=65 // pred_fallthru
          _
      $region66: #{tpu_custom_call.1} parent=5 // pred_fallthru
        _
      %p2661 = scmp.le.s32.totalorder 2, %s12
      // Predicated region
      $region75: #{tpu_custom_call.1} parent=5 // pred_check
        %p2662 = pneg %p2661
      $region76: #{tpu_custom_call.1} parent=5 // pred_check_branch
        %2664 = sbr.rel (%p2662) target = $region78
      $region77: #{tpu_custom_call.1} parent=5 // pred_region
        %s2665 = ssub.s32 %s12, 2
        // Predicated region
        $region79: #{tpu_custom_call.1} parent=77 // pred_check
          %p2666 = pneg %p133
        $region80: #{tpu_custom_call.1} parent=77 // pred_check_branch
          %2668 = sbr.rel (%p2666) target = $region82
        $region81: #{tpu_custom_call.1} parent=77 // pred_region
          %s2669 = sand.u32 %s118, 1
          %s2670 = scalar_lea.sflag [#allocation4], %s2669
          %s2671 = sand.u32 %s118, 1
          %s2672 = smul.addr %s2671, 640
          %s2673 = scalar_lea.vmem [#allocation3], %s2672
          %2674 = dma.done %s2670, 10240
        $region82: #{tpu_custom_call.1} parent=77 // pred_fallthru
          _
      $region78: #{tpu_custom_call.1} parent=5 // pred_fallthru
        _
    $region6: #{tpu_custom_call.1} parent=1 // loop_footer
      %s16 = sadd.s32 1, %s12
    $region7: #{tpu_custom_call.1} parent=1 // loop_footer_branch
      %11 = sbr.rel target = $region3
    $region8: #{tpu_custom_call.1} parent=1 // loop_exit
      _
    %2675 = vsyncpa [#allocation4], 1
    %s2676 = scalar_lea.sflag [#allocation4], 1
    %2677 = vsyncpa %s2676, 1

</llo_original>
